<compile_context>
chip_gen: v7x
topology: tpu7x:2x2x1
jax: 0.10.0
libtpu: 0.0.40
codegen_flags: <defaults>
</compile_context>

<pallas_src>
import functools
import math

import jax
import jax.numpy as jnp
import numpy as np
from jax.experimental import pallas as pl
from jax.experimental.pallas import tpu as pltpu


C_IN = 201     # autoencoder input / output channels
C_PAD = 256    # lane-padded channel count for HBM-facing tensors
C1 = 100       # conv1 out channels (logical)
C2 = 50        # conv2 out channels (logical)
C1P = 128      # conv1 out channels, lane-padded
C2P = 128      # conv2 out channels, lane-padded (= t_conv1 in channels)
CT1P = 128     # t_conv1 per-tap out channels, lane-padded (= t_conv2 in channels)


# ----------------------------- kernel helpers -----------------------------

def _conv1d_same_k3(x_bf16, w_ref, b_ref, period, c_tap):
    """Conv1d(kernel=3, padding=1) on a flat (n_elems * period, Cin) slab.

    y[t] = x[t-1] @ W0 + x[t] @ W1 + x[t+1] @ W2 + b  (zero-padded per element)

    All three taps are fused into a single (Cin, 3*c_tap) matmul; tap results
    are static 128-lane slices shifted along the time (sublane) axis with the
    XLU (pltpu.roll) and per-element boundary rows are zeroed with an iota
    mask, so the wide input is streamed through the MXU exactly once.
    """
    rows = x_bf16.shape[0]
    y = jnp.dot(x_bf16, w_ref[...], preferred_element_type=jnp.float32)  # (rows, 3*c_tap)
    s0 = y[:, :c_tap]                    # tap for x[t-1] contribution
    s1 = y[:, c_tap:2 * c_tap]           # tap for x[t]
    s2 = y[:, 2 * c_tap:]                # tap for x[t+1]
    t = jax.lax.broadcasted_iota(jnp.int32, (rows, 1), 0) % period
    out = s1 + b_ref[...]
    out = out + jnp.where(t == 0, 0.0, pltpu.roll(s0, 1, axis=0))
    out = out + jnp.where(t == period - 1, 0.0, pltpu.roll(s2, rows - 1, axis=0))
    return out


def _maxpool2(h):
    # MaxPool1d(2, 2) along the (flattened) time axis; per-element lengths are
    # even so pairs never cross element boundaries.  (Reshape-based; only
    # worth replacing if a Mosaic dump shows a relayout pass here.)
    rows, c = h.shape
    return jnp.max(h.reshape(rows // 2, 2, c), axis=1)


def autoenc_kernel(x_ref, w1_ref, b1_ref, w2_ref, b2_ref, w3_ref, b3_ref,
                   w4_ref, b4_ref, o_ref, *, seq_len):
    x = x_ref[...]                                                     # (R, 256) bf16
    h = jnp.maximum(
        _conv1d_same_k3(x, w1_ref, b1_ref, seq_len, C1P), 0.0)        # (R, 128) f32
    h = _maxpool2(h)                                                   # (R/2, 128)
    h = jnp.maximum(
        _conv1d_same_k3(h.astype(jnp.bfloat16), w2_ref, b2_ref,
                        seq_len // 2, C2P), 0.0)                       # (R/2, 128)
    h = _maxpool2(h)                                                   # (R/4, 128)

    # t_conv1 (kernel=2, stride=2): both taps fused into one (128, 2*128)
    # matmul; lanes [0:128] = even output step, [128:256] = odd output step.
    z = jnp.dot(h.astype(jnp.bfloat16), w3_ref[...],
                preferred_element_type=jnp.float32) + b3_ref[...]      # (R/4, 256)
    z = jnp.maximum(z, 0.0).astype(jnp.bfloat16)

    # t_conv2: block-diagonal fused weight (256, 1024) = [[W4, 0], [0, W4]]
    # applied to the full z slab.  Output row v directly holds the 4 output
    # time steps 4v..4v+3 side by side (4 x 256 lanes) -> single full store,
    # no concatenate; the wrapper's reshape restores time-major for free.
    y = jnp.dot(z, w4_ref[...], preferred_element_type=jnp.float32) + b4_ref[...]
    o_ref[...] = y.astype(o_ref.dtype)                                 # (R/4, 1024)


# ------------------------------- wrapper ----------------------------------

def _is_v7x():
    try:
        return "v7" in jax.devices()[0].device_kind.lower()
    except Exception:
        return False


def _choose_bt(B, L, is_v7):
    """Batch elements per grid step.

    Targets ~8192 rows/step (v5e/v6e, ~50 MiB live VMEM) or ~4096 (v7x,
    ~25 MiB live; 64 MiB physical VMEM there).  When the grid has more than
    one block, bt*L is kept a multiple of 64 so the bf16 input block and the
    bf16 (bt*L/4, 1024) output block stay (16, 128)-tile aligned.  On v7x we
    also try to keep >= 2 grid blocks so both TensorCores get work.
    """
    target_rows = 4096 if is_v7 else 8192
    bt = max(1, min(B, target_rows // L))
    align = 64 // math.gcd(L, 64)          # bt % align == 0  <=>  bt*L % 64 == 0

    if is_v7 and (B // 2) >= align:
        bt = min(bt, max(align, ((B + 1) // 2 // align) * align))
    if bt < B:
        bt = max(align, (bt // align) * align)
    return min(bt, B)


def conv_autoencoder_pallas(x, params):
    """x: (B, 1, 201, L) float32  ->  (B, 201, L) float32."""
    kw1, kb1, kw2, kb2, kw3, kb3, kw4, kb4 = params
    B, _, C, L = x.shape
    assert C == C_IN and L % 4 == 0
    out_dtype = x.dtype

    # NOTE: this transpose/pad/cast and the final reshape/slice/transpose are
    # pure XLA relayout passes (an extra HBM read+write each).  If the
    # surrounding model can produce/consume channels-last (B, L, C) slabs
    # directly, dropping them is a ~1.5-2x end-to-end win on this small model.
    x_lc = jnp.transpose(x.reshape(B, C, L), (0, 2, 1))          # (B, L, 201)
    x_lc = jnp.pad(x_lc, ((0, 0), (0, 0), (0, C_PAD - C)))       # (B, L, 256)
    x_lc = x_lc.astype(jnp.bfloat16)

    is_v7 = _is_v7x()
    bt = _choose_bt(B, L, is_v7)
    n_blk = pl.cdiv(B, bt)
    b_pad = n_blk * bt
    if b_pad != B:
        x_lc = jnp.pad(x_lc, ((0, b_pad - B), (0, 0), (0, 0)))

    x2d = x_lc.reshape(b_pad * L, C_PAD)                         # (Bp*L, 256)
    out_rows = b_pad * L // 4

    def full_spec(a):
        nd = a.ndim
        return pl.BlockSpec(a.shape, lambda i, _nd=nd: (0,) * _nd)

    R = b_pad * L
    flops = (2 * R * C_PAD * (3 * C1P)              # conv1 fused taps
             + 2 * (R // 2) * C1P * (3 * C2P)       # conv2 fused taps
             + 2 * (R // 4) * C2P * (2 * CT1P)      # t_conv1 fused taps
             + 2 * (R // 4) * (2 * CT1P) * (4 * C_PAD))  # t_conv2 block-diag
    bytes_accessed = (x2d.size * x2d.dtype.itemsize
                      + out_rows * 4 * C_PAD * 2    # bf16 output
                      + sum(int(np.prod(p.shape)) * p.dtype.itemsize
                            for p in params))

    vmem_limit = (48 if is_v7 else 100) * 1024 * 1024

    out2d = pl.pallas_call(
        functools.partial(autoenc_kernel, seq_len=L),
        out_shape=jax.ShapeDtypeStruct((out_rows, 4 * C_PAD), jnp.bfloat16),
        grid=(n_blk,),
        in_specs=[
            pl.BlockSpec((bt * L, C_PAD), lambda i: (i, 0)),
            full_spec(kw1), full_spec(kb1), full_spec(kw2), full_spec(kb2),
            full_spec(kw3), full_spec(kb3), full_spec(kw4), full_spec(kb4),
        ],
        out_specs=pl.BlockSpec((bt * L // 4, 4 * C_PAD), lambda i: (i, 0)),
        compiler_params=pltpu.CompilerParams(
            dimension_semantics=("parallel",),
            vmem_limit_bytes=vmem_limit),
        cost_estimate=pl.CostEstimate(flops=flops, transcendentals=0,
                                      bytes_accessed=bytes_accessed),
    )(x2d, kw1, kb1, kw2, kb2, kw3, kb3, kw4, kb4)

    # (Bp*L/4, 4*256) -> (Bp, L, 256): pure row-major relayout (the 2x2
    # ConvTranspose time interleave), then drop batch/channel padding.
    out = out2d.reshape(b_pad, L, C_PAD)[:B, :, :C_IN]
    return jnp.transpose(out, (0, 2, 1)).astype(out_dtype)       # (B, 201, L)


# --------------------------- pure-JAX reference ----------------------------

def ref_forward(x, torch_params):
    w1, b1, w2, b2, tw1, tb1, tw2, tb2 = torch_params            # PyTorch layouts
    B, _, C, L = x.shape
    h = x.reshape(B, C, L)

    def conv1d(h, w, b):  # w: (Cout, Cin, 3), padding=1
        y = jax.lax.conv_general_dilated(
            h, w, window_strides=(1,), padding=[(1, 1)],
            dimension_numbers=("NCH", "OIH", "NCH"))
        return y + b[None, :, None]

    def maxpool(h):
        b_, c_, l_ = h.shape
        return jnp.max(h.reshape(b_, c_, l_ // 2, 2), axis=-1)

    def tconv(h, w, b):   # w: (Cin, Cout, 2), stride=2
        y0 = jnp.einsum("bct,co->bot", h, w[:, :, 0])
        y1 = jnp.einsum("bct,co->bot", h, w[:, :, 1])
        y = jnp.stack([y0, y1], axis=-1).reshape(h.shape[0], w.shape[1],
                                                 2 * h.shape[2])
        return y + b[None, :, None]

    h = jnp.maximum(conv1d(h, w1, b1), 0.0)
    h = maxpool(h)
    h = jnp.maximum(conv1d(h, w2, b2), 0.0)
    h = maxpool(h)
    h = jnp.maximum(tconv(h, tw1, tb1), 0.0)
    h = tconv(h, tw2, tb2)
    return h


# ------------------------------ param init ---------------------------------

def make_kernel_params(torch_params):
    """Convert PyTorch-layout params to kernel layout (fused taps, padded, bf16)."""
    w1, b1, w2, b2, tw1, tb1, tw2, tb2 = torch_params

    def pad2(a, rows, cols):
        return jnp.pad(a, ((0, rows - a.shape[0]), (0, cols - a.shape[1])))

    def pad1(a, n):
        return jnp.pad(a, (0, n - a.shape[0]))

    # conv1: (100, 201, 3) -> fused (256, 3*128); Cin 201->256, per-tap Cout 100->128.
    kw1 = jnp.concatenate([pad2(w1[:, :, k].T, C_PAD, C1P) for k in range(3)],
                          axis=1).astype(jnp.bfloat16)
    kb1 = pad1(b1, C1P).reshape(1, -1)                           # padded lanes stay 0
    # conv2: (50, 100, 3) -> fused (128, 3*128); Cin 100->128, per-tap Cout 50->128.
    kw2 = jnp.concatenate([pad2(w2[:, :, k].T, C1P, C2P) for k in range(3)],
                          axis=1).astype(jnp.bfloat16)
    kb2 = pad1(b2, C2P).reshape(1, -1)
    # t_conv1: (50, 100, 2) -> fused (128, 2*128); Cin 50->128, per-tap Cout 100->128.
    kw3 = jnp.concatenate([pad2(tw1[:, :, k], C2P, CT1P) for k in range(2)],
                          axis=1).astype(jnp.bfloat16)
    kb3 = jnp.tile(pad1(tb1, CT1P), 2).reshape(1, -1)
    # t_conv2: (100, 201, 2) -> per-tap (128, 256) -> fused per-step (128, 512)
    # -> block-diagonal over the 2 t_conv1 time steps: (256, 1024).
    w4 = jnp.concatenate([pad2(tw2[:, :, k], CT1P, C_PAD) for k in range(2)],
                         axis=1)                                  # (128, 512)
    zeros = jnp.zeros_like(w4)
    kw4 = jnp.concatenate(
        [jnp.concatenate([w4, zeros], axis=1),
         jnp.concatenate([zeros, w4], axis=1)], axis=0).astype(jnp.bfloat16)
    kb4 = jnp.tile(pad1(tb2, C_PAD), 4).reshape(1, -1)
    return (kw1, kb1, kw2, kb2, kw3, kb3, kw4, kb4)


def init_params(key):
    def u(k, shape, fan_in):
        bound = 1.0 / np.sqrt(fan_in)
        return jax.random.uniform(k, shape, jnp.float32, -bound, bound)

    ks = jax.random.split(key, 8)
    # PyTorch layouts.
    w1 = u(ks[0], (100, 201, 3), 201 * 3); b1 = u(ks[1], (100,), 201 * 3)
    w2 = u(ks[2], (50, 100, 3), 100 * 3);  b2 = u(ks[3], (50,), 100 * 3)
    tw1 = u(ks[4], (50, 100, 2), 100 * 2); tb1 = u(ks[5], (100,), 100 * 2)
    tw2 = u(ks[6], (100, 201, 2), 201 * 2); tb2 = u(ks[7], (201,), 201 * 2)
    torch_params = (w1, b1, w2, b2, tw1, tb1, tw2, tb2)
    return torch_params, make_kernel_params(torch_params)


# --------------------------------- main -------------------------------------

if __name__ == "__main__":
    key = jax.random.PRNGKey(0)
    kx, kp = jax.random.split(key)

    B, L = 2, 16                                   # small; L divisible by 4
    x = jax.random.normal(kx, (B, 1, 201, L), jnp.float32)

    torch_params, kernel_params = init_params(kp)

    out = jax.jit(conv_autoencoder_pallas)(x, kernel_params)
    out = jax.block_until_ready(out)

    ref = ref_forward(x, torch_params)
    assert out.shape == (B, 201, L)
    # bf16 matmuls / bf16 kernel output (f32 accumulation) -> relaxed tolerance
    # vs. the f32 reference.
    np.testing.assert_allclose(np.asarray(out), np.asarray(ref),
                               atol=2e-2, rtol=2e-2)

    print("KERNEL_OK")
</pallas_src>

<mosaic_0001>
module attributes {stable_mosaic.version = 11 : i64} {
  func.func @autoenc_kernel(%arg0: i32, %arg1: memref<32x256xbf16, #tpu.memory_space<vmem>>, %arg2: memref<256x384xbf16, #tpu.memory_space<vmem>>, %arg3: memref<1x128xf32, #tpu.memory_space<vmem>>, %arg4: memref<128x384xbf16, #tpu.memory_space<vmem>>, %arg5: memref<1x128xf32, #tpu.memory_space<vmem>>, %arg6: memref<128x256xbf16, #tpu.memory_space<vmem>>, %arg7: memref<1x256xf32, #tpu.memory_space<vmem>>, %arg8: memref<256x1024xbf16, #tpu.memory_space<vmem>>, %arg9: memref<1x1024xf32, #tpu.memory_space<vmem>>, %arg10: memref<8x1024xbf16, #tpu.memory_space<vmem>>) attributes {dimension_semantics = [#tpu.dimension_semantics<parallel>], iteration_bounds = array<i64: 1>, scalar_prefetch = 0 : i64, scratch_operands = 0 : i64, tpu.core_type = #tpu.core_type<tc>, window_params = [{transform_indices = @transform_0, window_bounds = array<i64: 32, 256>}, {pipeline_mode = #tpu.pipeline_mode<synchronous>, transform_indices = @transform_1, window_bounds = array<i64: 256, 384>}, {pipeline_mode = #tpu.pipeline_mode<synchronous>, transform_indices = @transform_2, window_bounds = array<i64: 1, 128>}, {pipeline_mode = #tpu.pipeline_mode<synchronous>, transform_indices = @transform_3, window_bounds = array<i64: 128, 384>}, {pipeline_mode = #tpu.pipeline_mode<synchronous>, transform_indices = @transform_4, window_bounds = array<i64: 1, 128>}, {pipeline_mode = #tpu.pipeline_mode<synchronous>, transform_indices = @transform_5, window_bounds = array<i64: 128, 256>}, {pipeline_mode = #tpu.pipeline_mode<synchronous>, transform_indices = @transform_6, window_bounds = array<i64: 1, 256>}, {pipeline_mode = #tpu.pipeline_mode<synchronous>, transform_indices = @transform_7, window_bounds = array<i64: 256, 1024>}, {pipeline_mode = #tpu.pipeline_mode<synchronous>, transform_indices = @transform_8, window_bounds = array<i64: 1, 1024>}, {transform_indices = @transform_9, window_bounds = array<i64: 8, 1024>}]} {
    %c0 = arith.constant 0 : index
    %c0_0 = arith.constant 0 : index
    %0 = vector.load %arg1[%c0, %c0_0] : memref<32x256xbf16, #tpu.memory_space<vmem>>, vector<32x256xbf16>
    %c0_1 = arith.constant 0 : index
    %c0_2 = arith.constant 0 : index
    %1 = vector.load %arg2[%c0_1, %c0_2] : memref<256x384xbf16, #tpu.memory_space<vmem>>, vector<256x384xbf16>
    %cst = arith.constant dense<0.000000e+00> : vector<32x384xf32>
    %2 = tpu.matmul %0, %1, %cst {dimension_numbers = #tpu.dot_dimension_numbers<[1], [0], [0], [1], [0, 0, 1, 1], [], []>} : vector<32x256xbf16>, vector<256x384xbf16>, vector<32x384xf32> -> vector<32x384xf32>
    %3 = vector.extract_strided_slice %2 {offsets = [0, 0], sizes = [32, 128], strides = [1, 1]} : vector<32x384xf32> to vector<32x128xf32>
    %4 = vector.extract_strided_slice %2 {offsets = [0, 128], sizes = [32, 128], strides = [1, 1]} : vector<32x384xf32> to vector<32x128xf32>
    %5 = vector.extract_strided_slice %2 {offsets = [0, 256], sizes = [32, 128], strides = [1, 1]} : vector<32x384xf32> to vector<32x128xf32>
    %6 = tpu.iota {dimensions = array<i32: 0>} : vector<32x1xi32>
    %c16_i32 = arith.constant 16 : i32
    %c0_i32 = arith.constant 0 : i32
    %7 = arith.cmpi eq, %c16_i32, %c0_i32 : i32
    %c1_i32 = arith.constant 1 : i32
    %8 = arith.select %7, %c1_i32, %c16_i32 : i32
    %9 = vector.broadcast %8 : i32 to vector<32x1xi32>
    %10 = arith.remsi %6, %9 : vector<32x1xi32>
    %c0_i32_3 = arith.constant 0 : i32
    %11 = vector.broadcast %c0_i32_3 : i32 to vector<32x1xi32>
    %12 = arith.cmpi ne, %10, %11 : vector<32x1xi32>
    %c0_i32_4 = arith.constant 0 : i32
    %13 = vector.broadcast %c0_i32_4 : i32 to vector<32x1xi32>
    %14 = arith.cmpi slt, %10, %13 : vector<32x1xi32>
    %c0_i32_5 = arith.constant 0 : i32
    %15 = arith.cmpi slt, %8, %c0_i32_5 : i32
    %16 = vector.broadcast %15 : i1 to vector<32x1xi1>
    %17 = vector.broadcast %16 : vector<32x1xi1> to vector<32x1xi1>
    %18 = arith.xori %14, %17 : vector<32x1xi1>
    %19 = arith.andi %18, %12 : vector<32x1xi1>
    %20 = vector.broadcast %8 : i32 to vector<32x1xi32>
    %21 = arith.addi %10, %20 : vector<32x1xi32>
    %22 = arith.select %19, %21, %10 : vector<32x1xi1>, vector<32x1xi32>
    %c0_6 = arith.constant 0 : index
    %c0_7 = arith.constant 0 : index
    %23 = vector.load %arg3[%c0_6, %c0_7] : memref<1x128xf32, #tpu.memory_space<vmem>>, vector<1x128xf32>
    %24 = vector.broadcast %23 : vector<1x128xf32> to vector<32x128xf32>
    %25 = arith.addf %4, %24 : vector<32x128xf32>
    %c0_i32_8 = arith.constant 0 : i32
    %26 = vector.broadcast %c0_i32_8 : i32 to vector<32x1xi32>
    %27 = arith.cmpi eq, %22, %26 : vector<32x1xi32>
    %c1_i32_9 = arith.constant 1 : i32
    %28 = tpu.dynamic_rotate %3 by %c1_i32_9 dim 0 : vector<32x128xf32>, i32 -> vector<32x128xf32>
    %cst_10 = arith.constant 0.000000e+00 : f32
    %29 = vector.shape_cast %27 : vector<32x1xi1> to vector<32x1xi1>
    %30 = vector.broadcast %29 : vector<32x1xi1> to vector<32x128xi1>
    %31 = vector.broadcast %cst_10 : f32 to vector<32x128xf32>
    %32 = arith.select %30, %31, %28 : vector<32x128xi1>, vector<32x128xf32>
    %33 = arith.addf %25, %32 : vector<32x128xf32>
    %c15_i32 = arith.constant 15 : i32
    %34 = vector.broadcast %c15_i32 : i32 to vector<32x1xi32>
    %35 = arith.cmpi eq, %22, %34 : vector<32x1xi32>
    %c31_i32 = arith.constant 31 : i32
    %36 = tpu.dynamic_rotate %5 by %c31_i32 dim 0 : vector<32x128xf32>, i32 -> vector<32x128xf32>
    %cst_11 = arith.constant 0.000000e+00 : f32
    %37 = vector.shape_cast %35 : vector<32x1xi1> to vector<32x1xi1>
    %38 = vector.broadcast %37 : vector<32x1xi1> to vector<32x128xi1>
    %39 = vector.broadcast %cst_11 : f32 to vector<32x128xf32>
    %40 = arith.select %38, %39, %36 : vector<32x128xi1>, vector<32x128xf32>
    %41 = arith.addf %33, %40 : vector<32x128xf32>
    %cst_12 = arith.constant 0.000000e+00 : f32
    %42 = vector.broadcast %cst_12 : f32 to vector<32x128xf32>
    %43 = arith.maximumf %41, %42 : vector<32x128xf32>
    %44 = vector.shape_cast %43 : vector<32x128xf32> to vector<16x2x128xf32>
    %cst_13 = arith.constant dense<0xFF800000> : vector<16x128xf32>
    %45 = vector.multi_reduction <maximumf>, %44, %cst_13 [1] : vector<16x2x128xf32> to vector<16x128xf32>
    %46 = arith.truncf %45 : vector<16x128xf32> to vector<16x128xbf16>
    %c0_14 = arith.constant 0 : index
    %c0_15 = arith.constant 0 : index
    %47 = vector.load %arg4[%c0_14, %c0_15] : memref<128x384xbf16, #tpu.memory_space<vmem>>, vector<128x384xbf16>
    %cst_16 = arith.constant dense<0.000000e+00> : vector<16x384xf32>
    %48 = tpu.matmul %46, %47, %cst_16 {dimension_numbers = #tpu.dot_dimension_numbers<[1], [0], [0], [1], [0, 0, 1, 1], [], []>} : vector<16x128xbf16>, vector<128x384xbf16>, vector<16x384xf32> -> vector<16x384xf32>
    %49 = vector.extract_strided_slice %48 {offsets = [0, 0], sizes = [16, 128], strides = [1, 1]} : vector<16x384xf32> to vector<16x128xf32>
    %50 = vector.extract_strided_slice %48 {offsets = [0, 128], sizes = [16, 128], strides = [1, 1]} : vector<16x384xf32> to vector<16x128xf32>
    %51 = vector.extract_strided_slice %48 {offsets = [0, 256], sizes = [16, 128], strides = [1, 1]} : vector<16x384xf32> to vector<16x128xf32>
    %52 = tpu.iota {dimensions = array<i32: 0>} : vector<16x1xi32>
    %c8_i32 = arith.constant 8 : i32
    %c0_i32_17 = arith.constant 0 : i32
    %53 = arith.cmpi eq, %c8_i32, %c0_i32_17 : i32
    %c1_i32_18 = arith.constant 1 : i32
    %54 = arith.select %53, %c1_i32_18, %c8_i32 : i32
    %55 = vector.broadcast %54 : i32 to vector<16x1xi32>
    %56 = arith.remsi %52, %55 : vector<16x1xi32>
    %c0_i32_19 = arith.constant 0 : i32
    %57 = vector.broadcast %c0_i32_19 : i32 to vector<16x1xi32>
    %58 = arith.cmpi ne, %56, %57 : vector<16x1xi32>
    %c0_i32_20 = arith.constant 0 : i32
    %59 = vector.broadcast %c0_i32_20 : i32 to vector<16x1xi32>
    %60 = arith.cmpi slt, %56, %59 : vector<16x1xi32>
    %c0_i32_21 = arith.constant 0 : i32
    %61 = arith.cmpi slt, %54, %c0_i32_21 : i32
    %62 = vector.broadcast %61 : i1 to vector<16x1xi1>
    %63 = vector.broadcast %62 : vector<16x1xi1> to vector<16x1xi1>
    %64 = arith.xori %60, %63 : vector<16x1xi1>
    %65 = arith.andi %64, %58 : vector<16x1xi1>
    %66 = vector.broadcast %54 : i32 to vector<16x1xi32>
    %67 = arith.addi %56, %66 : vector<16x1xi32>
    %68 = arith.select %65, %67, %56 : vector<16x1xi1>, vector<16x1xi32>
    %c0_22 = arith.constant 0 : index
    %c0_23 = arith.constant 0 : index
    %69 = vector.load %arg5[%c0_22, %c0_23] : memref<1x128xf32, #tpu.memory_space<vmem>>, vector<1x128xf32>
    %70 = vector.broadcast %69 : vector<1x128xf32> to vector<16x128xf32>
    %71 = arith.addf %50, %70 : vector<16x128xf32>
    %c0_i32_24 = arith.constant 0 : i32
    %72 = vector.broadcast %c0_i32_24 : i32 to vector<16x1xi32>
    %73 = arith.cmpi eq, %68, %72 : vector<16x1xi32>
    %c1_i32_25 = arith.constant 1 : i32
    %74 = tpu.dynamic_rotate %49 by %c1_i32_25 dim 0 : vector<16x128xf32>, i32 -> vector<16x128xf32>
    %cst_26 = arith.constant 0.000000e+00 : f32
    %75 = vector.shape_cast %73 : vector<16x1xi1> to vector<16x1xi1>
    %76 = vector.broadcast %75 : vector<16x1xi1> to vector<16x128xi1>
    %77 = vector.broadcast %cst_26 : f32 to vector<16x128xf32>
    %78 = arith.select %76, %77, %74 : vector<16x128xi1>, vector<16x128xf32>
    %79 = arith.addf %71, %78 : vector<16x128xf32>
    %c7_i32 = arith.constant 7 : i32
    %80 = vector.broadcast %c7_i32 : i32 to vector<16x1xi32>
    %81 = arith.cmpi eq, %68, %80 : vector<16x1xi32>
    %c15_i32_27 = arith.constant 15 : i32
    %82 = tpu.dynamic_rotate %51 by %c15_i32_27 dim 0 : vector<16x128xf32>, i32 -> vector<16x128xf32>
    %cst_28 = arith.constant 0.000000e+00 : f32
    %83 = vector.shape_cast %81 : vector<16x1xi1> to vector<16x1xi1>
    %84 = vector.broadcast %83 : vector<16x1xi1> to vector<16x128xi1>
    %85 = vector.broadcast %cst_28 : f32 to vector<16x128xf32>
    %86 = arith.select %84, %85, %82 : vector<16x128xi1>, vector<16x128xf32>
    %87 = arith.addf %79, %86 : vector<16x128xf32>
    %cst_29 = arith.constant 0.000000e+00 : f32
    %88 = vector.broadcast %cst_29 : f32 to vector<16x128xf32>
    %89 = arith.maximumf %87, %88 : vector<16x128xf32>
    %90 = vector.shape_cast %89 : vector<16x128xf32> to vector<8x2x128xf32>
    %cst_30 = arith.constant dense<0xFF800000> : vector<8x128xf32>
    %91 = vector.multi_reduction <maximumf>, %90, %cst_30 [1] : vector<8x2x128xf32> to vector<8x128xf32>
    %92 = arith.truncf %91 : vector<8x128xf32> to vector<8x128xbf16>
    %c0_31 = arith.constant 0 : index
    %c0_32 = arith.constant 0 : index
    %93 = vector.load %arg6[%c0_31, %c0_32] : memref<128x256xbf16, #tpu.memory_space<vmem>>, vector<128x256xbf16>
    %cst_33 = arith.constant dense<0.000000e+00> : vector<8x256xf32>
    %94 = tpu.matmul %92, %93, %cst_33 {dimension_numbers = #tpu.dot_dimension_numbers<[1], [0], [0], [1], [0, 0, 1, 1], [], []>} : vector<8x128xbf16>, vector<128x256xbf16>, vector<8x256xf32> -> vector<8x256xf32>
    %c0_34 = arith.constant 0 : index
    %c0_35 = arith.constant 0 : index
    %95 = vector.load %arg7[%c0_34, %c0_35] : memref<1x256xf32, #tpu.memory_space<vmem>>, vector<1x256xf32>
    %96 = vector.broadcast %95 : vector<1x256xf32> to vector<8x256xf32>
    %97 = arith.addf %94, %96 : vector<8x256xf32>
    %cst_36 = arith.constant 0.000000e+00 : f32
    %98 = vector.broadcast %cst_36 : f32 to vector<8x256xf32>
    %99 = arith.maximumf %97, %98 : vector<8x256xf32>
    %100 = arith.truncf %99 : vector<8x256xf32> to vector<8x256xbf16>
    %c0_37 = arith.constant 0 : index
    %c0_38 = arith.constant 0 : index
    %101 = vector.load %arg8[%c0_37, %c0_38] : memref<256x1024xbf16, #tpu.memory_space<vmem>>, vector<256x1024xbf16>
    %cst_39 = arith.constant dense<0.000000e+00> : vector<8x1024xf32>
    %102 = tpu.matmul %100, %101, %cst_39 {dimension_numbers = #tpu.dot_dimension_numbers<[1], [0], [0], [1], [0, 0, 1, 1], [], []>} : vector<8x256xbf16>, vector<256x1024xbf16>, vector<8x1024xf32> -> vector<8x1024xf32>
    %c0_40 = arith.constant 0 : index
    %c0_41 = arith.constant 0 : index
    %103 = vector.load %arg9[%c0_40, %c0_41] : memref<1x1024xf32, #tpu.memory_space<vmem>>, vector<1x1024xf32>
    %104 = vector.broadcast %103 : vector<1x1024xf32> to vector<8x1024xf32>
    %105 = arith.addf %102, %104 : vector<8x1024xf32>
    %106 = arith.truncf %105 : vector<8x1024xf32> to vector<8x1024xbf16>
    %c0_42 = arith.constant 0 : index
    %c0_43 = arith.constant 0 : index
    %107 = vector.load %arg10[%c0_42, %c0_43] : memref<8x1024xbf16, #tpu.memory_space<vmem>>, vector<8x1024xbf16>
    tpu.vector_store %arg10[%c0_42, %c0_43], %106 {strides = array<i32>} : memref<8x1024xbf16, #tpu.memory_space<vmem>>, vector<8x1024xbf16>,
    return
  }
  func.func @transform_0(%arg0: i32) -> (i32, i32) {
    %c0_i32 = arith.constant 0 : i32
    %c0_i32_0 = arith.constant 0 : i32
    return %arg0, %c0_i32 : i32, i32
  }
  func.func @transform_1(%arg0: i32) -> (i32, i32) {
    %c0_i32 = arith.constant 0 : i32
    %c0_i32_0 = arith.constant 0 : i32
    %c0_i32_1 = arith.constant 0 : i32
    return %c0_i32, %c0_i32_0 : i32, i32
  }
  func.func @transform_2(%arg0: i32) -> (i32, i32) {
    %c0_i32 = arith.constant 0 : i32
    %c0_i32_0 = arith.constant 0 : i32
    %c0_i32_1 = arith.constant 0 : i32
    return %c0_i32, %c0_i32_0 : i32, i32
  }
  func.func @transform_3(%arg0: i32) -> (i32, i32) {
    %c0_i32 = arith.constant 0 : i32
    %c0_i32_0 = arith.constant 0 : i32
    %c0_i32_1 = arith.constant 0 : i32
    return %c0_i32, %c0_i32_0 : i32, i32
  }
  func.func @transform_4(%arg0: i32) -> (i32, i32) {
    %c0_i32 = arith.constant 0 : i32
    %c0_i32_0 = arith.constant 0 : i32
    %c0_i32_1 = arith.constant 0 : i32
    return %c0_i32, %c0_i32_0 : i32, i32
  }
  func.func @transform_5(%arg0: i32) -> (i32, i32) {
    %c0_i32 = arith.constant 0 : i32
    %c0_i32_0 = arith.constant 0 : i32
    %c0_i32_1 = arith.constant 0 : i32
    return %c0_i32, %c0_i32_0 : i32, i32
  }
  func.func @transform_6(%arg0: i32) -> (i32, i32) {
    %c0_i32 = arith.constant 0 : i32
    %c0_i32_0 = arith.constant 0 : i32
    %c0_i32_1 = arith.constant 0 : i32
    return %c0_i32, %c0_i32_0 : i32, i32
  }
  func.func @transform_7(%arg0: i32) -> (i32, i32) {
    %c0_i32 = arith.constant 0 : i32
    %c0_i32_0 = arith.constant 0 : i32
    %c0_i32_1 = arith.constant 0 : i32
    return %c0_i32, %c0_i32_0 : i32, i32
  }
  func.func @transform_8(%arg0: i32) -> (i32, i32) {
    %c0_i32 = arith.constant 0 : i32
    %c0_i32_0 = arith.constant 0 : i32
    %c0_i32_1 = arith.constant 0 : i32
    return %c0_i32, %c0_i32_0 : i32, i32
  }
  func.func @transform_9(%arg0: i32) -> (i32, i32) {
    %c0_i32 = arith.constant 0 : i32
    %c0_i32_0 = arith.constant 0 : i32
    return %arg0, %c0_i32 : i32, i32
  }
}

</mosaic_0001>

<llo_original>
// kernel: conv_autoencoder_pallas.1
$region0: #{conv_autoencoder_pallas.1}
  #allocation0 [shape = 'u32[]', space=smem, size = 0x4, offset = 0x4, fixed_abs, tag = 'smem constant byte address 0x4 - core index']
  #allocation1 [shape = 'u32[144,128]{1,0:T(1,128)}', space=vmem, size = 0x12000, scoped, tag = 'internal scratch']
  %s0 = inlined_call_operand.hbm [shape: bf16[32,256], index: 0, kind: input, shape index: {}]
  %s1 = inlined_call_operand.hbm [shape: bf16[256,384], index: 1, kind: input, shape index: {}]
  %s2 = inlined_call_operand.hbm [shape: f32[1,128], index: 2, kind: input, shape index: {}]
  %s3 = inlined_call_operand.hbm [shape: bf16[128,384], index: 3, kind: input, shape index: {}]
  %s4 = inlined_call_operand.hbm [shape: f32[1,128], index: 4, kind: input, shape index: {}]
  %s5 = inlined_call_operand.hbm [shape: bf16[128,256], index: 5, kind: input, shape index: {}]
  %s6 = inlined_call_operand.hbm [shape: f32[1,256], index: 6, kind: input, shape index: {}]
  %s7 = inlined_call_operand.hbm [shape: bf16[256,1024], index: 7, kind: input, shape index: {}]
  %s8 = inlined_call_operand.hbm [shape: f32[1,1024], index: 8, kind: input, shape index: {}]
  %s9 = inlined_call_operand.hbm [shape: bf16[8,1024], index: 9, kind: output, shape index: {}]
  %s10 = sld [smem:[#allocation0]]
  $region82: #{conv_autoencoder_pallas.1} parent=0
    _
  %s12 = ssub.s32 1, %s10
  %s13 = scalar_select 0, %s12, %s10
  $region1: #{conv_autoencoder_pallas.1} parent=0
    #allocation2 [shape = 'u8[16384]{0}', space=vmem, size = 0x4000, scoped, tag = 'input window, operand 0, single buffered']
    #allocation3 [shape = 's32[1]{0}', space=sflag, size = 0x4, scoped, tag = 'scoped memory for conv_autoencoder_pallas.1']
    #allocation4 [shape = 's32[1]{0}', space=sflag, size = 0x4, scoped, tag = 'scoped memory for conv_autoencoder_pallas.1']
    #allocation5 [shape = 'u8[196608]{0}', space=vmem, size = 0x30000, scoped, tag = 'input window, operand 1, single buffered']
    #allocation6 [shape = 's32[1]{0}', space=sflag, size = 0x4, scoped, tag = 'scoped memory for conv_autoencoder_pallas.1']
    #allocation7 [shape = 'u8[512]{0}', space=vmem, size = 0x400, scoped, tag = 'input window, operand 2, single buffered']
    #allocation8 [shape = 'u8[98304]{0}', space=vmem, size = 0x18000, scoped, tag = 'input window, operand 3, single buffered']
    #allocation9 [shape = 's32[1]{0}', space=sflag, size = 0x4, scoped, tag = 'scoped memory for conv_autoencoder_pallas.1']
    #allocation10 [shape = 'u8[512]{0}', space=vmem, size = 0x400, scoped, tag = 'input window, operand 4, single buffered']
    #allocation11 [shape = 'u8[65536]{0}', space=vmem, size = 0x10000, scoped, tag = 'input window, operand 5, single buffered']
    #allocation12 [shape = 's32[1]{0}', space=sflag, size = 0x4, scoped, tag = 'scoped memory for conv_autoencoder_pallas.1']
    #allocation13 [shape = 'u8[1024]{0}', space=vmem, size = 0x400, scoped, tag = 'input window, operand 6, single buffered']
    #allocation14 [shape = 'u8[524288]{0}', space=vmem, size = 0x80000, scoped, tag = 'input window, operand 7, single buffered']
    #allocation15 [shape = 's32[1]{0}', space=sflag, size = 0x4, scoped, tag = 'scoped memory for conv_autoencoder_pallas.1']
    #allocation16 [shape = 'u8[4096]{0}', space=vmem, size = 0x1000, scoped, tag = 'input window, operand 8, single buffered']
    #allocation17 [shape = 'u8[16384]{0}', space=vmem, size = 0x4000, scoped, tag = 'output window, operand 0, single buffered']
    %14 = vsyncpa [#allocation3], 0
    %15 = vsyncpa [#allocation6], 0
    %16 = vsyncpa [#allocation9], 0
    %17 = vsyncpa [#allocation12], 0
    %18 = vsyncpa [#allocation15], 0
    %19 = vsyncpa [#allocation4], 0
    // Predicated region
    $region2: #{conv_autoencoder_pallas.1} parent=1 // pred_check
      _
    $region3: #{conv_autoencoder_pallas.1} parent=1 // pred_check_branch
      %21 = sbr.rel (0) target = $region5
    $region4: #{conv_autoencoder_pallas.1} parent=1 // pred_region
      %s23 = ssub.s32 512, 512
      %24 = vsyncadd [#allocation3], %s23
      %s25 = sshll.u32 [#allocation2], 4
      %s26 = int_to_ptr.vmem [resolvable:$true] %s25
      %31 = dma.hbm_to_vmem [thread:$0]  %s0, 512, %s26, [#allocation3], 128, 128, 8
    $region5: #{conv_autoencoder_pallas.1} parent=1 // pred_fallthru
      _
    // Predicated region
    $region6: #{conv_autoencoder_pallas.1} parent=1 // pred_check
      _
    $region7: #{conv_autoencoder_pallas.1} parent=1 // pred_check_branch
      %33 = sbr.rel (0) target = $region9
    $region8: #{conv_autoencoder_pallas.1} parent=1 // pred_region
      %s35 = ssub.s32 6144, 6144
      %36 = vsyncadd [#allocation6], %s35
      %s37 = sshll.u32 [#allocation5], 4
      %s38 = int_to_ptr.vmem [resolvable:$true] %s37
      %43 = dma.hbm_to_vmem [thread:$0]  %s1, 6144, %s38, [#allocation6], 192, 192, 12
    $region9: #{conv_autoencoder_pallas.1} parent=1 // pred_fallthru
      _
    // Predicated region
    $region10: #{conv_autoencoder_pallas.1} parent=1 // pred_check
      _
    $region11: #{conv_autoencoder_pallas.1} parent=1 // pred_check_branch
      %45 = sbr.rel (0) target = $region13
    $region12: #{conv_autoencoder_pallas.1} parent=1 // pred_region
      %s47 = ssub.s32 16, 16
      %48 = vsyncadd [#allocation6], %s47
      %s50 = sshll.u32 [#allocation7], 4
      %s51 = int_to_ptr.vmem [resolvable:$true] %s50
      %53 = dma.hbm_to_vmem [thread:$0]  %s2, 16, %s51, [#allocation6]
    $region13: #{conv_autoencoder_pallas.1} parent=1 // pred_fallthru
      _
    // Predicated region
    $region14: #{conv_autoencoder_pallas.1} parent=1 // pred_check
      _
    $region15: #{conv_autoencoder_pallas.1} parent=1 // pred_check_branch
      %55 = sbr.rel (0) target = $region17
    $region16: #{conv_autoencoder_pallas.1} parent=1 // pred_region
      %s57 = ssub.s32 3072, 3072
      %58 = vsyncadd [#allocation9], %s57
      %s59 = sshll.u32 [#allocation8], 4
      %s60 = int_to_ptr.vmem [resolvable:$true] %s59
      %65 = dma.hbm_to_vmem [thread:$0]  %s3, 3072, %s60, [#allocation9], 192, 192, 12
    $region17: #{conv_autoencoder_pallas.1} parent=1 // pred_fallthru
      _
    // Predicated region
    $region18: #{conv_autoencoder_pallas.1} parent=1 // pred_check
      _
    $region19: #{conv_autoencoder_pallas.1} parent=1 // pred_check_branch
      %67 = sbr.rel (0) target = $region21
    $region20: #{conv_autoencoder_pallas.1} parent=1 // pred_region
      %s69 = ssub.s32 16, 16
      %70 = vsyncadd [#allocation9], %s69
      %s72 = sshll.u32 [#allocation10], 4
      %s73 = int_to_ptr.vmem [resolvable:$true] %s72
      %75 = dma.hbm_to_vmem [thread:$0]  %s4, 16, %s73, [#allocation9]
    $region21: #{conv_autoencoder_pallas.1} parent=1 // pred_fallthru
      _
    // Predicated region
    $region22: #{conv_autoencoder_pallas.1} parent=1 // pred_check
      _
    $region23: #{conv_autoencoder_pallas.1} parent=1 // pred_check_branch
      %77 = sbr.rel (0) target = $region25
    $region24: #{conv_autoencoder_pallas.1} parent=1 // pred_region
      %s79 = ssub.s32 2048, 2048
      %80 = vsyncadd [#allocation12], %s79
      %s81 = sshll.u32 [#allocation11], 4
      %s82 = int_to_ptr.vmem [resolvable:$true] %s81
      %87 = dma.hbm_to_vmem [thread:$0]  %s5, 2048, %s82, [#allocation12], 128, 128, 8
    $region25: #{conv_autoencoder_pallas.1} parent=1 // pred_fallthru
      _
    // Predicated region
    $region26: #{conv_autoencoder_pallas.1} parent=1 // pred_check
      _
    $region27: #{conv_autoencoder_pallas.1} parent=1 // pred_check_branch
      %89 = sbr.rel (0) target = $region29
    $region28: #{conv_autoencoder_pallas.1} parent=1 // pred_region
      %s91 = ssub.s32 32, 32
      %92 = vsyncadd [#allocation12], %s91
      %s94 = sshll.u32 [#allocation13], 4
      %s95 = int_to_ptr.vmem [resolvable:$true] %s94
      %97 = dma.hbm_to_vmem [thread:$0]  %s6, 32, %s95, [#allocation12]
    $region29: #{conv_autoencoder_pallas.1} parent=1 // pred_fallthru
      _
    // Predicated region
    $region30: #{conv_autoencoder_pallas.1} parent=1 // pred_check
      _
    $region31: #{conv_autoencoder_pallas.1} parent=1 // pred_check_branch
      %99 = sbr.rel (0) target = $region33
    $region32: #{conv_autoencoder_pallas.1} parent=1 // pred_region
      %s101 = ssub.s32 16384, 16384
      %102 = vsyncadd [#allocation15], %s101
      %s103 = sshll.u32 [#allocation14], 4
      %s104 = int_to_ptr.vmem [resolvable:$true] %s103
      %109 = dma.hbm_to_vmem [thread:$0]  %s7, 16384, %s104, [#allocation15], 512, 512, 32
    $region33: #{conv_autoencoder_pallas.1} parent=1 // pred_fallthru
      _
    // Predicated region
    $region34: #{conv_autoencoder_pallas.1} parent=1 // pred_check
      _
    $region35: #{conv_autoencoder_pallas.1} parent=1 // pred_check_branch
      %111 = sbr.rel (0) target = $region37
    $region36: #{conv_autoencoder_pallas.1} parent=1 // pred_region
      %s113 = ssub.s32 128, 128
      %114 = vsyncadd [#allocation15], %s113
      %s116 = sshll.u32 [#allocation16], 4
      %s117 = int_to_ptr.vmem [resolvable:$true] %s116
      %119 = dma.hbm_to_vmem [thread:$0]  %s8, 128, %s117, [#allocation15]
    $region37: #{conv_autoencoder_pallas.1} parent=1 // pred_fallthru
      _
    // Predicated region
    $region38: #{conv_autoencoder_pallas.1} parent=1 // pred_check
      _
    $region39: #{conv_autoencoder_pallas.1} parent=1 // pred_check_branch
      %121 = sbr.rel (0) target = $region41
    $region40: #{conv_autoencoder_pallas.1} parent=1 // pred_region
      %122 = dma.done [#allocation3], 512
    $region41: #{conv_autoencoder_pallas.1} parent=1 // pred_fallthru
      _
    // Predicated region
    $region42: #{conv_autoencoder_pallas.1} parent=1 // pred_check
      _
    $region43: #{conv_autoencoder_pallas.1} parent=1 // pred_check_branch
      %124 = sbr.rel (0) target = $region45
    $region44: #{conv_autoencoder_pallas.1} parent=1 // pred_region
      %125 = dma.done [#allocation6], 6144
    $region45: #{conv_autoencoder_pallas.1} parent=1 // pred_fallthru
      _
    // Predicated region
    $region46: #{conv_autoencoder_pallas.1} parent=1 // pred_check
      _
    $region47: #{conv_autoencoder_pallas.1} parent=1 // pred_check_branch
      %127 = sbr.rel (0) target = $region49
    $region48: #{conv_autoencoder_pallas.1} parent=1 // pred_region
      %128 = dma.done [#allocation6], 16
    $region49: #{conv_autoencoder_pallas.1} parent=1 // pred_fallthru
      _
    // Predicated region
    $region50: #{conv_autoencoder_pallas.1} parent=1 // pred_check
      _
    $region51: #{conv_autoencoder_pallas.1} parent=1 // pred_check_branch
      %130 = sbr.rel (0) target = $region53
    $region52: #{conv_autoencoder_pallas.1} parent=1 // pred_region
      %131 = dma.done [#allocation9], 3072
    $region53: #{conv_autoencoder_pallas.1} parent=1 // pred_fallthru
      _
    // Predicated region
    $region54: #{conv_autoencoder_pallas.1} parent=1 // pred_check
      _
    $region55: #{conv_autoencoder_pallas.1} parent=1 // pred_check_branch
      %133 = sbr.rel (0) target = $region57
    $region56: #{conv_autoencoder_pallas.1} parent=1 // pred_region
      %134 = dma.done [#allocation9], 16
    $region57: #{conv_autoencoder_pallas.1} parent=1 // pred_fallthru
      _
    // Predicated region
    $region58: #{conv_autoencoder_pallas.1} parent=1 // pred_check
      _
    $region59: #{conv_autoencoder_pallas.1} parent=1 // pred_check_branch
      %136 = sbr.rel (0) target = $region61
    $region60: #{conv_autoencoder_pallas.1} parent=1 // pred_region
      %137 = dma.done [#allocation12], 2048
    $region61: #{conv_autoencoder_pallas.1} parent=1 // pred_fallthru
      _
    // Predicated region
    $region62: #{conv_autoencoder_pallas.1} parent=1 // pred_check
      _
    $region63: #{conv_autoencoder_pallas.1} parent=1 // pred_check_branch
      %139 = sbr.rel (0) target = $region65
    $region64: #{conv_autoencoder_pallas.1} parent=1 // pred_region
      %140 = dma.done [#allocation12], 32
    $region65: #{conv_autoencoder_pallas.1} parent=1 // pred_fallthru
      _
    // Predicated region
    $region66: #{conv_autoencoder_pallas.1} parent=1 // pred_check
      _
    $region67: #{conv_autoencoder_pallas.1} parent=1 // pred_check_branch
      %142 = sbr.rel (0) target = $region69
    $region68: #{conv_autoencoder_pallas.1} parent=1 // pred_region
      %143 = dma.done [#allocation15], 16384
    $region69: #{conv_autoencoder_pallas.1} parent=1 // pred_fallthru
      _
    // Predicated region
    $region70: #{conv_autoencoder_pallas.1} parent=1 // pred_check
      _
    $region71: #{conv_autoencoder_pallas.1} parent=1 // pred_check_branch
      %145 = sbr.rel (0) target = $region73
    $region72: #{conv_autoencoder_pallas.1} parent=1 // pred_region
      %146 = dma.done [#allocation15], 128
    $region73: #{conv_autoencoder_pallas.1} parent=1 // pred_fallthru
      _
    %v148 = vld [vmem:[#allocation2] sm:$0xff]
    %v149 = vld [vmem:[#allocation2 + $0x8] sm:$0xff]
    %v150 = vld [vmem:[#allocation2 + $0x10] sm:$0xff]
    %v151 = vld [vmem:[#allocation2 + $0x18] sm:$0xff]
    %v152 = vld [vmem:[#allocation5] sm:$0xff]
    %v153 = vld [vmem:[#allocation5 + $0x8] sm:$0xf]
    %v154 = vld [vmem:[#allocation5 + $0xc] sm:$0xff]
    %v155 = vld [vmem:[#allocation5 + $0x14] sm:$0xf]
    %v156 = vld [vmem:[#allocation5 + $0x18] sm:$0xff]
    %v157 = vld [vmem:[#allocation5 + $0x20] sm:$0xf]
    %v158 = vld [vmem:[#allocation5 + $0x24] sm:$0xff]
    %v159 = vld [vmem:[#allocation5 + $0x2c] sm:$0xf]
    %v160 = vld [vmem:[#allocation5 + $0x30] sm:$0xff]
    %v161 = vld [vmem:[#allocation5 + $0x38] sm:$0xf]
    %v162 = vld [vmem:[#allocation5 + $0x3c] sm:$0xff]
    %v163 = vld [vmem:[#allocation5 + $0x44] sm:$0xf]
    %v164 = vld [vmem:[#allocation5 + $0x48] sm:$0xff]
    %v165 = vld [vmem:[#allocation5 + $0x50] sm:$0xf]
    %v166 = vld [vmem:[#allocation5 + $0x54] sm:$0xff]
    %v167 = vld [vmem:[#allocation5 + $0x5c] sm:$0xf]
    %v168 = vld [vmem:[#allocation5 + $0x60] sm:$0xff]
    %v169 = vld [vmem:[#allocation5 + $0x68] sm:$0xf]
    %v170 = vld [vmem:[#allocation5 + $0x6c] sm:$0xff]
    %v171 = vld [vmem:[#allocation5 + $0x74] sm:$0xf]
    %v172 = vld [vmem:[#allocation5 + $0x78] sm:$0xff]
    %v173 = vld [vmem:[#allocation5 + $0x80] sm:$0xf]
    %v174 = vld [vmem:[#allocation5 + $0x84] sm:$0xff]
    %v175 = vld [vmem:[#allocation5 + $0x8c] sm:$0xf]
    %v176 = vld [vmem:[#allocation5 + $0x90] sm:$0xff]
    %v177 = vld [vmem:[#allocation5 + $0x98] sm:$0xf]
    %v178 = vld [vmem:[#allocation5 + $0x9c] sm:$0xff]
    %v179 = vld [vmem:[#allocation5 + $0xa4] sm:$0xf]
    %v180 = vld [vmem:[#allocation5 + $0xa8] sm:$0xff]
    %v181 = vld [vmem:[#allocation5 + $0xb0] sm:$0xf]
    %v182 = vld [vmem:[#allocation5 + $0xb4] sm:$0xff]
    %v183 = vld [vmem:[#allocation5 + $0xbc] sm:$0xf]
    %v184 = vld [vmem:[#allocation5 + $0xc0] sm:$0xff]
    %v185 = vld [vmem:[#allocation5 + $0xc8] sm:$0xf]
    %v186 = vld [vmem:[#allocation5 + $0xcc] sm:$0xff]
    %v187 = vld [vmem:[#allocation5 + $0xd4] sm:$0xf]
    %v188 = vld [vmem:[#allocation5 + $0xd8] sm:$0xff]
    %v189 = vld [vmem:[#allocation5 + $0xe0] sm:$0xf]
    %v190 = vld [vmem:[#allocation5 + $0xe4] sm:$0xff]
    %v191 = vld [vmem:[#allocation5 + $0xec] sm:$0xf]
    %v192 = vld [vmem:[#allocation5 + $0xf0] sm:$0xff]
    %v193 = vld [vmem:[#allocation5 + $0xf8] sm:$0xf]
    %v194 = vld [vmem:[#allocation5 + $0xfc] sm:$0xff]
    %v195 = vld [vmem:[#allocation5 + $0x104] sm:$0xf]
    %v196 = vld [vmem:[#allocation5 + $0x108] sm:$0xff]
    %v197 = vld [vmem:[#allocation5 + $0x110] sm:$0xf]
    %v198 = vld [vmem:[#allocation5 + $0x114] sm:$0xff]
    %v199 = vld [vmem:[#allocation5 + $0x11c] sm:$0xf]
    %v200 = vld [vmem:[#allocation5 + $0x120] sm:$0xff]
    %v201 = vld [vmem:[#allocation5 + $0x128] sm:$0xf]
    %v202 = vld [vmem:[#allocation5 + $0x12c] sm:$0xff]
    %v203 = vld [vmem:[#allocation5 + $0x134] sm:$0xf]
    %v204 = vld [vmem:[#allocation5 + $0x138] sm:$0xff]
    %v205 = vld [vmem:[#allocation5 + $0x140] sm:$0xf]
    %v206 = vld [vmem:[#allocation5 + $0x144] sm:$0xff]
    %v207 = vld [vmem:[#allocation5 + $0x14c] sm:$0xf]
    %v208 = vld [vmem:[#allocation5 + $0x150] sm:$0xff]
    %v209 = vld [vmem:[#allocation5 + $0x158] sm:$0xf]
    %v210 = vld [vmem:[#allocation5 + $0x15c] sm:$0xff]
    %v211 = vld [vmem:[#allocation5 + $0x164] sm:$0xf]
    %v212 = vld [vmem:[#allocation5 + $0x168] sm:$0xff]
    %v213 = vld [vmem:[#allocation5 + $0x170] sm:$0xf]
    %v214 = vld [vmem:[#allocation5 + $0x174] sm:$0xff]
    %v215 = vld [vmem:[#allocation5 + $0x17c] sm:$0xf]
    %v220 = vunpack.c.l.b16 %v148
    %v221 = vunpack.c.h.b16 %v148
    %v222 = vunpack.c.l.b16 %v149
    %v223 = vunpack.c.h.b16 %v149
    %v224 = vunpack.c.l.b16 %v150
    %v225 = vunpack.c.h.b16 %v150
    %v226 = vunpack.c.l.b16 %v151
    %v227 = vunpack.c.h.b16 %v151
    %v228 = vpack.c.b16 %v222, %v220
    %v229 = vpack.c.b16 %v223, %v221
    %v230 = vpack.c.b16 %v226, %v224
    %v231 = vpack.c.b16 %v227, %v225
    %v300 = vunpack.c.l.b16 %v152
    %v301 = vunpack.c.h.b16 %v152
    %v302 = vunpack.c.l.b16 %v153
    %v303 = vunpack.c.l.b16 %v154
    %v304 = vunpack.c.h.b16 %v154
    %v305 = vunpack.c.l.b16 %v155
    %v306 = vunpack.c.l.b16 %v156
    %v307 = vunpack.c.h.b16 %v156
    %v308 = vunpack.c.l.b16 %v157
    %v309 = vunpack.c.l.b16 %v158
    %v310 = vunpack.c.h.b16 %v158
    %v311 = vunpack.c.l.b16 %v159
    %v312 = vunpack.c.l.b16 %v160
    %v313 = vunpack.c.h.b16 %v160
    %v314 = vunpack.c.l.b16 %v161
    %v315 = vunpack.c.l.b16 %v162
    %v316 = vunpack.c.h.b16 %v162
    %v317 = vunpack.c.l.b16 %v163
    %v318 = vunpack.c.l.b16 %v164
    %v319 = vunpack.c.h.b16 %v164
    %v320 = vunpack.c.l.b16 %v165
    %v321 = vunpack.c.l.b16 %v166
    %v322 = vunpack.c.h.b16 %v166
    %v323 = vunpack.c.l.b16 %v167
    %v324 = vunpack.c.l.b16 %v168
    %v325 = vunpack.c.h.b16 %v168
    %v326 = vunpack.c.l.b16 %v169
    %v327 = vunpack.c.l.b16 %v170
    %v328 = vunpack.c.h.b16 %v170
    %v329 = vunpack.c.l.b16 %v171
    %v330 = vunpack.c.l.b16 %v172
    %v331 = vunpack.c.h.b16 %v172
    %v332 = vunpack.c.l.b16 %v173
    %v333 = vunpack.c.l.b16 %v174
    %v334 = vunpack.c.h.b16 %v174
    %v335 = vunpack.c.l.b16 %v175
    %v336 = vunpack.c.l.b16 %v176
    %v337 = vunpack.c.h.b16 %v176
    %v338 = vunpack.c.l.b16 %v177
    %v339 = vunpack.c.l.b16 %v178
    %v340 = vunpack.c.h.b16 %v178
    %v341 = vunpack.c.l.b16 %v179
    %v342 = vunpack.c.l.b16 %v180
    %v343 = vunpack.c.h.b16 %v180
    %v344 = vunpack.c.l.b16 %v181
    %v345 = vunpack.c.l.b16 %v182
    %v346 = vunpack.c.h.b16 %v182
    %v347 = vunpack.c.l.b16 %v183
    %v348 = vunpack.c.l.b16 %v184
    %v349 = vunpack.c.h.b16 %v184
    %v350 = vunpack.c.l.b16 %v185
    %v351 = vunpack.c.l.b16 %v186
    %v352 = vunpack.c.h.b16 %v186
    %v353 = vunpack.c.l.b16 %v187
    %v354 = vunpack.c.l.b16 %v188
    %v355 = vunpack.c.h.b16 %v188
    %v356 = vunpack.c.l.b16 %v189
    %v357 = vunpack.c.l.b16 %v190
    %v358 = vunpack.c.h.b16 %v190
    %v359 = vunpack.c.l.b16 %v191
    %v360 = vunpack.c.l.b16 %v192
    %v361 = vunpack.c.h.b16 %v192
    %v362 = vunpack.c.l.b16 %v193
    %v363 = vunpack.c.l.b16 %v194
    %v364 = vunpack.c.h.b16 %v194
    %v365 = vunpack.c.l.b16 %v195
    %v366 = vunpack.c.l.b16 %v196
    %v367 = vunpack.c.h.b16 %v196
    %v368 = vunpack.c.l.b16 %v197
    %v369 = vunpack.c.l.b16 %v198
    %v370 = vunpack.c.h.b16 %v198
    %v371 = vunpack.c.l.b16 %v199
    %v372 = vunpack.c.l.b16 %v200
    %v373 = vunpack.c.h.b16 %v200
    %v374 = vunpack.c.l.b16 %v201
    %v375 = vunpack.c.l.b16 %v202
    %v376 = vunpack.c.h.b16 %v202
    %v377 = vunpack.c.l.b16 %v203
    %v378 = vunpack.c.l.b16 %v204
    %v379 = vunpack.c.h.b16 %v204
    %v380 = vunpack.c.l.b16 %v205
    %v381 = vunpack.c.l.b16 %v206
    %v382 = vunpack.c.h.b16 %v206
    %v383 = vunpack.c.l.b16 %v207
    %v384 = vunpack.c.l.b16 %v208
    %v385 = vunpack.c.h.b16 %v208
    %v386 = vunpack.c.l.b16 %v209
    %v387 = vunpack.c.l.b16 %v210
    %v388 = vunpack.c.h.b16 %v210
    %v389 = vunpack.c.l.b16 %v211
    %v390 = vunpack.c.l.b16 %v212
    %v391 = vunpack.c.h.b16 %v212
    %v392 = vunpack.c.l.b16 %v213
    %v393 = vunpack.c.l.b16 %v214
    %v394 = vunpack.c.h.b16 %v214
    %v395 = vunpack.c.l.b16 %v215
    %v396 = vpack.c.b16 %v303, %v300
    %v397 = vpack.c.b16 %v304, %v301
    %v398 = vpack.c.b16 %v305, %v302
    %v399 = vpack.c.b16 %v309, %v306
    %v400 = vpack.c.b16 %v310, %v307
    %v401 = vpack.c.b16 %v311, %v308
    %v402 = vpack.c.b16 %v315, %v312
    %v403 = vpack.c.b16 %v316, %v313
    %v404 = vpack.c.b16 %v317, %v314
    %v405 = vpack.c.b16 %v321, %v318
    %v406 = vpack.c.b16 %v322, %v319
    %v407 = vpack.c.b16 %v323, %v320
    %v408 = vpack.c.b16 %v327, %v324
    %v409 = vpack.c.b16 %v328, %v325
    %v410 = vpack.c.b16 %v329, %v326
    %v411 = vpack.c.b16 %v333, %v330
    %v412 = vpack.c.b16 %v334, %v331
    %v413 = vpack.c.b16 %v335, %v332
    %v414 = vpack.c.b16 %v339, %v336
    %v415 = vpack.c.b16 %v340, %v337
    %v416 = vpack.c.b16 %v341, %v338
    %v417 = vpack.c.b16 %v345, %v342
    %v418 = vpack.c.b16 %v346, %v343
    %v419 = vpack.c.b16 %v347, %v344
    %v420 = vpack.c.b16 %v351, %v348
    %v421 = vpack.c.b16 %v352, %v349
    %v422 = vpack.c.b16 %v353, %v350
    %v423 = vpack.c.b16 %v357, %v354
    %v424 = vpack.c.b16 %v358, %v355
    %v425 = vpack.c.b16 %v359, %v356
    %v426 = vpack.c.b16 %v363, %v360
    %v427 = vpack.c.b16 %v364, %v361
    %v428 = vpack.c.b16 %v365, %v362
    %v429 = vpack.c.b16 %v369, %v366
    %v430 = vpack.c.b16 %v370, %v367
    %v431 = vpack.c.b16 %v371, %v368
    %v432 = vpack.c.b16 %v375, %v372
    %v433 = vpack.c.b16 %v376, %v373
    %v434 = vpack.c.b16 %v377, %v374
    %v435 = vpack.c.b16 %v381, %v378
    %v436 = vpack.c.b16 %v382, %v379
    %v437 = vpack.c.b16 %v383, %v380
    %v438 = vpack.c.b16 %v387, %v384
    %v439 = vpack.c.b16 %v388, %v385
    %v440 = vpack.c.b16 %v389, %v386
    %v441 = vpack.c.b16 %v393, %v390
    %v442 = vpack.c.b16 %v394, %v391
    %v443 = vpack.c.b16 %v395, %v392
    %492 = vmatprep.subr.bf16.mxu0 %v397
    %493 = vmatpush1.bf16.msra.mxu0 %v396
    %494 = vmatprep.subr.bf16.mxu0 %v400
    %495 = vmatpush1.bf16.msra.mxu0 %v399
    %496 = vmatprep.subr.bf16.mxu0 %v403
    %497 = vmatpush1.bf16.msra.mxu0 %v402
    %498 = vmatprep.subr.bf16.mxu0 %v406
    %499 = vmatpush1.bf16.msra.mxu0 %v405
    %500 = vmatprep.subr.bf16.mxu0 %v409
    %501 = vmatpush1.bf16.msra.mxu0 %v408
    %502 = vmatprep.subr.bf16.mxu0 %v412
    %503 = vmatpush1.bf16.msra.mxu0 %v411
    %504 = vmatprep.subr.bf16.mxu0 %v415
    %505 = vmatpush1.bf16.msra.mxu0 %v414
    %506 = vmatprep.subr.bf16.mxu0 %v418
    %507 = vmatpush1.bf16.msra.mxu0 %v417
    %508 = vmatprep.subr.bf16.mxu0 %v421
    %509 = vmatpush1.bf16.msra.mxu0 %v420
    %510 = vmatprep.subr.bf16.mxu0 %v424
    %511 = vmatpush1.bf16.msra.mxu0 %v423
    %512 = vmatprep.subr.bf16.mxu0 %v427
    %513 = vmatpush1.bf16.msra.mxu0 %v426
    %514 = vmatprep.subr.bf16.mxu0 %v430
    %515 = vmatpush1.bf16.msra.mxu0 %v429
    %516 = vmatprep.subr.bf16.mxu0 %v433
    %517 = vmatpush1.bf16.msra.mxu0 %v432
    %518 = vmatprep.subr.bf16.mxu0 %v436
    %519 = vmatpush1.bf16.msra.mxu0 %v435
    %520 = vmatprep.subr.bf16.mxu0 %v439
    %521 = vmatpush1.bf16.msra.mxu0 %v438
    %522 = vmatprep.subr.bf16.mxu0 %v442
    %523 = vmatpush1.bf16.msra.mxu0 %v441
    %524 = vmatprep.mubr.bf16.mxu0 %v229
    %525 = vmatmul.mubr.bf16.gmra.mrb[0].mxu0 %v228
    %v526 = vpop.f32.mrb[0].mxu0
    %v527 = vadd.f32 0.0, %v526
    %v528 = vpop.f32.mrb[0].mxu0
    %v529 = vadd.f32 0.0, %v528
    %v530 = vpop.f32.mrb[0].mxu0
    %v531 = vadd.f32 0.0, %v530
    %v532 = vpop.f32.mrb[0].mxu0
    %v533 = vadd.f32 0.0, %v532
    %534 = vmatprep.mubr.bf16.mxu0 %v231
    %535 = vmatmul.mubr.bf16.gmra.mrb[0].mxu0 %v230
    %v536 = vpop.f32.mrb[0].mxu0
    %v537 = vadd.f32 0.0, %v536
    %v538 = vpop.f32.mrb[0].mxu0
    %v539 = vadd.f32 0.0, %v538
    %v540 = vpop.f32.mrb[0].mxu0
    %v541 = vadd.f32 0.0, %v540
    %v542 = vpop.f32.mrb[0].mxu0
    %v543 = vadd.f32 0.0, %v542
    %544 = vdwg.mxu0
    %545 = vmatprep.subr.bf16.mxu0 0
    %546 = vmatpush1.bf16.msra.mxu0 %v398
    %547 = vmatprep.subr.bf16.mxu0 0
    %548 = vmatpush1.bf16.msra.mxu0 %v401
    %549 = vmatprep.subr.bf16.mxu0 0
    %550 = vmatpush1.bf16.msra.mxu0 %v404
    %551 = vmatprep.subr.bf16.mxu0 0
    %552 = vmatpush1.bf16.msra.mxu0 %v407
    %553 = vmatprep.subr.bf16.mxu0 0
    %554 = vmatpush1.bf16.msra.mxu0 %v410
    %555 = vmatprep.subr.bf16.mxu0 0
    %556 = vmatpush1.bf16.msra.mxu0 %v413
    %557 = vmatprep.subr.bf16.mxu0 0
    %558 = vmatpush1.bf16.msra.mxu0 %v416
    %559 = vmatprep.subr.bf16.mxu0 0
    %560 = vmatpush1.bf16.msra.mxu0 %v419
    %561 = vmatprep.subr.bf16.mxu0 0
    %562 = vmatpush1.bf16.msra.mxu0 %v422
    %563 = vmatprep.subr.bf16.mxu0 0
    %564 = vmatpush1.bf16.msra.mxu0 %v425
    %565 = vmatprep.subr.bf16.mxu0 0
    %566 = vmatpush1.bf16.msra.mxu0 %v428
    %567 = vmatprep.subr.bf16.mxu0 0
    %568 = vmatpush1.bf16.msra.mxu0 %v431
    %569 = vmatprep.subr.bf16.mxu0 0
    %570 = vmatpush1.bf16.msra.mxu0 %v434
    %571 = vmatprep.subr.bf16.mxu0 0
    %572 = vmatpush1.bf16.msra.mxu0 %v437
    %573 = vmatprep.subr.bf16.mxu0 0
    %574 = vmatpush1.bf16.msra.mxu0 %v440
    %575 = vmatprep.subr.bf16.mxu0 0
    %576 = vmatpush1.bf16.msra.mxu0 %v443
    %577 = vmatprep.mubr.bf16.mxu0 %v229
    %578 = vmatmul.mubr.bf16.gmra.mrb[0].mxu0 %v228
    %v579 = vpop.f32.mrb[0].mxu0
    %v580 = vadd.f32 0.0, %v579
    %v581 = vpop.f32.mrb[0].mxu0
    %v582 = vpop.f32.mrb[0].mxu0
    %v583 = vadd.f32 0.0, %v582
    %v584 = vpop.f32.mrb[0].mxu0
    %585 = vmatprep.mubr.bf16.mxu0 %v231
    %586 = vmatmul.mubr.bf16.gmra.mrb[0].mxu0 %v230
    %v587 = vpop.f32.mrb[0].mxu0
    %v588 = vadd.f32 0.0, %v587
    %v589 = vpop.f32.mrb[0].mxu0
    %v590 = vpop.f32.mrb[0].mxu0
    %v591 = vadd.f32 0.0, %v590
    %v592 = vpop.f32.mrb[0].mxu0
    %593 = vdwg.mxu0
    %v594 = vlaneseq
    %v595 = vshrl.u32 %v594, 7
    %v596 = vadd.s32 %v595, 8
    %v597 = vadd.s32 %v595, 16
    %v598 = vadd.s32 %v595, 24
    %vm599 = vcmp.lt.s32.totalorder %v595, 0
    %v600 = vsub.s32 0, %v595
    %v601 = vsel %vm599, %v600, %v595
    %v602 = vshrl.u32 %v601, 4
    %v603 = vand.u32 %v601, 15
    %v604 = vsub.s32 0, %v603
    %v605 = vsel %vm599, %v604, %v603
    %vm606 = vcmp.lt.s32.totalorder %v596, 0
    %v607 = vsub.s32 0, %v596
    %v608 = vsel %vm606, %v607, %v596
    %v609 = vshrl.u32 %v608, 4
    %v610 = vand.u32 %v608, 15
    %v611 = vsub.s32 0, %v610
    %v612 = vsel %vm606, %v611, %v610
    %vm613 = vcmp.lt.s32.totalorder %v597, 0
    %v614 = vsub.s32 0, %v597
    %v615 = vsel %vm613, %v614, %v597
    %v616 = vshrl.u32 %v615, 4
    %v617 = vand.u32 %v615, 15
    %v618 = vsub.s32 0, %v617
    %v619 = vsel %vm613, %v618, %v617
    %vm620 = vcmp.lt.s32.totalorder %v598, 0
    %v621 = vsub.s32 0, %v598
    %v622 = vsel %vm620, %v621, %v598
    %v623 = vshrl.u32 %v622, 4
    %v624 = vand.u32 %v622, 15
    %v625 = vsub.s32 0, %v624
    %v626 = vsel %vm620, %v625, %v624
    %vm627 = vcmp.ne.s32.totalorder %v605, 0
    %vm628 = vcmp.ne.s32.totalorder %v612, 0
    %vm629 = vcmp.ne.s32.totalorder %v619, 0
    %vm630 = vcmp.ne.s32.totalorder %v626, 0
    %vm631 = vcmp.lt.s32.totalorder %v605, 0
    %vm632 = vcmp.lt.s32.totalorder %v612, 0
    %vm633 = vcmp.lt.s32.totalorder %v619, 0
    %vm634 = vcmp.lt.s32.totalorder %v626, 0
    %vm635 = vmand %vm631, %vm627
    %vm636 = vmand %vm632, %vm628
    %vm637 = vmand %vm633, %vm629
    %vm638 = vmand %vm634, %vm630
    %v639 = vadd.s32 %v605, 16
    %v640 = vadd.s32 %v612, 16
    %v641 = vadd.s32 %v619, 16
    %v642 = vadd.s32 %v626, 16
    %v643 = vsel %vm635, %v639, %v605
    %v644 = vsel %vm636, %v640, %v612
    %v645 = vsel %vm637, %v641, %v619
    %v646 = vsel %vm638, %v642, %v626
    %v647 = vld [vmem:[#allocation7] sm:$0x1]
    %v649 = vlaneseq
    %v650 = vshrl.u32 %v649, 7
    %v651 = vsub.s32 0, %v650
    %v652 = vrot.slane %v647, %v651
    %v654 = vadd.f32 %v529, %v652
    %v655 = vadd.f32 %v533, %v652
    %v656 = vadd.f32 %v539, %v652
    %v657 = vadd.f32 %v543, %v652
    %vm658 = vcmp.eq.s32.totalorder %v643, 0
    %vm659 = vcmp.eq.s32.totalorder %v644, 0
    %vm660 = vcmp.eq.s32.totalorder %v645, 0
    %vm661 = vcmp.eq.s32.totalorder %v646, 0
    %v662 = vrot.slane %v527, 7
    %v663 = vrot.slane %v531, 7
    %v664 = vrot.slane %v537, 7
    %v665 = vrot.slane %v541, 7
    %vm666 = vcmp.lt.s32.totalorder %v595, 1
    %v667 = vsel %vm666, %v664, %v665
    %v668 = vsel %vm666, %v663, %v664
    %v669 = vsel %vm666, %v662, %v663
    %v670 = vsel %vm666, %v665, %v662
    %v671 = vsel %vm658, 1, 0
    %v672 = vsel %vm659, 1, 0
    %v673 = vsel %vm660, 1, 0
    %v674 = vsel %vm661, 1, 0
    %vm675 = vcmp.eq.s32.totalorder %v671, 1
    %vm676 = vcmp.eq.s32.totalorder %v672, 1
    %vm677 = vcmp.eq.s32.totalorder %v673, 1
    %vm678 = vcmp.eq.s32.totalorder %v674, 1
    %v679 = vsel %vm675, 0.0, %v670
    %v680 = vsel %vm676, 0.0, %v669
    %v681 = vsel %vm677, 0.0, %v668
    %v682 = vsel %vm678, 0.0, %v667
    %v683 = vadd.f32 %v654, %v679
    %v684 = vadd.f32 %v655, %v680
    %v685 = vadd.f32 %v656, %v681
    %v686 = vadd.f32 %v657, %v682
    %vm687 = vcmp.eq.s32.totalorder %v643, 15
    %vm688 = vcmp.eq.s32.totalorder %v644, 15
    %vm689 = vcmp.eq.s32.totalorder %v645, 15
    %vm690 = vcmp.eq.s32.totalorder %v646, 15
    %v691 = vrot.slane %v580, 1
    %v692 = vrot.slane %v583, 1
    %v693 = vrot.slane %v588, 1
    %v694 = vrot.slane %v591, 1
    %vm695 = vcmp.lt.s32.totalorder %v595, 7
    %v696 = vsel %vm695, %v693, %v694
    %v697 = vsel %vm695, %v692, %v693
    %v698 = vsel %vm695, %v691, %v692
    %v699 = vsel %vm695, %v694, %v691
    %v700 = vsel %vm687, 1, 0
    %v701 = vsel %vm688, 1, 0
    %v702 = vsel %vm689, 1, 0
    %v703 = vsel %vm690, 1, 0
    %vm704 = vcmp.eq.s32.totalorder %v700, 1
    %vm705 = vcmp.eq.s32.totalorder %v701, 1
    %vm706 = vcmp.eq.s32.totalorder %v702, 1
    %vm707 = vcmp.eq.s32.totalorder %v703, 1
    %v708 = vsel %vm704, 0.0, %v698
    %v709 = vsel %vm705, 0.0, %v697
    %v710 = vsel %vm706, 0.0, %v696
    %v711 = vsel %vm707, 0.0, %v699
    %v712 = vadd.f32 %v683, %v708
    %v713 = vadd.f32 %v684, %v709
    %v714 = vadd.f32 %v685, %v710
    %v715 = vadd.f32 %v686, %v711
    %v716 = vmax.f32 %v712, 0.0
    %v717 = vmax.f32 %v713, 0.0
    %v718 = vmax.f32 %v714, 0.0
    %v719 = vmax.f32 %v715, 0.0
    %v724 = vcombine.high %v716, %v716
    %v726 = vunpack.c.l.s4 1983009808
    %v727 = vunpack.c.0.s8 %v726
    %v728 = vlaneseq
    %v729 = vshrl.u32 %v728, 7
    %v730 = vsub.s32 %v727, %v729
    %v731 = vrot.slane %v716, %v730
    %v733 = vunpack.c.l.s4 1983009808
    %v734 = vunpack.c.0.s8 %v733
    %v735 = vlaneseq
    %v736 = vshrl.u32 %v735, 7
    %v737 = vsub.s32 %v734, %v736
    %v738 = vrot.slane %v724, %v737
    %v739 = vcombine.high %v731, %v731
    %v740 = vcombine.high %v738, %v738
    %v741 = vcombine.high %v717, %v717
    %v743 = vunpack.c.l.s4 1983009808
    %v744 = vunpack.c.0.s8 %v743
    %v745 = vlaneseq
    %v746 = vshrl.u32 %v745, 7
    %v747 = vsub.s32 %v744, %v746
    %v748 = vrot.slane %v717, %v747
    %v750 = vunpack.c.l.s4 1983009808
    %v751 = vunpack.c.0.s8 %v750
    %v752 = vlaneseq
    %v753 = vshrl.u32 %v752, 7
    %v754 = vsub.s32 %v751, %v753
    %v755 = vrot.slane %v741, %v754
    %v756 = vcombine.high %v748, %v748
    %v757 = vcombine.high %v755, %v755
    %v758 = vcombine.high %v718, %v718
    %v760 = vunpack.c.l.s4 1983009808
    %v761 = vunpack.c.0.s8 %v760
    %v762 = vlaneseq
    %v763 = vshrl.u32 %v762, 7
    %v764 = vsub.s32 %v761, %v763
    %v765 = vrot.slane %v718, %v764
    %v767 = vunpack.c.l.s4 1983009808
    %v768 = vunpack.c.0.s8 %v767
    %v769 = vlaneseq
    %v770 = vshrl.u32 %v769, 7
    %v771 = vsub.s32 %v768, %v770
    %v772 = vrot.slane %v758, %v771
    %v773 = vcombine.high %v765, %v765
    %v774 = vcombine.high %v772, %v772
    %v775 = vcombine.high %v719, %v719
    %v777 = vunpack.c.l.s4 1983009808
    %v778 = vunpack.c.0.s8 %v777
    %v779 = vlaneseq
    %v780 = vshrl.u32 %v779, 7
    %v781 = vsub.s32 %v778, %v780
    %v782 = vrot.slane %v719, %v781
    %v784 = vunpack.c.l.s4 1983009808
    %v785 = vunpack.c.0.s8 %v784
    %v786 = vlaneseq
    %v787 = vshrl.u32 %v786, 7
    %v788 = vsub.s32 %v785, %v787
    %v789 = vrot.slane %v775, %v788
    %v790 = vcombine.high %v782, %v782
    %v791 = vcombine.high %v789, %v789
    %vm808 = vcmask 1041408
    %v809 = vsel %vm808, %v731, -inf
    %v810 = vrot.slane %v809, 4
    %v811 = vmax.f32 %v809, %v810
    %v812 = vrot.slane %v811, 2
    %v813 = vmax.f32 %v811, %v812
    %v814 = vrot.slane %v813, 1
    %v815 = vmax.f32 %v813, %v814
    %v816 = vsel %vm808, %v739, -inf
    %v817 = vrot.slane %v816, 4
    %v818 = vmax.f32 %v816, %v817
    %v819 = vrot.slane %v818, 2
    %v820 = vmax.f32 %v818, %v819
    %v821 = vrot.slane %v820, 1
    %v822 = vmax.f32 %v820, %v821
    %v823 = vsel %vm808, %v738, -inf
    %v824 = vrot.slane %v823, 4
    %v825 = vmax.f32 %v823, %v824
    %v826 = vrot.slane %v825, 2
    %v827 = vmax.f32 %v825, %v826
    %v828 = vrot.slane %v827, 1
    %v829 = vmax.f32 %v827, %v828
    %v830 = vsel %vm808, %v740, -inf
    %v831 = vrot.slane %v830, 4
    %v832 = vmax.f32 %v830, %v831
    %v833 = vrot.slane %v832, 2
    %v834 = vmax.f32 %v832, %v833
    %v835 = vrot.slane %v834, 1
    %v836 = vmax.f32 %v834, %v835
    %v837 = vsel %vm808, %v748, -inf
    %v838 = vrot.slane %v837, 4
    %v839 = vmax.f32 %v837, %v838
    %v840 = vrot.slane %v839, 2
    %v841 = vmax.f32 %v839, %v840
    %v842 = vrot.slane %v841, 1
    %v843 = vmax.f32 %v841, %v842
    %v844 = vsel %vm808, %v756, -inf
    %v845 = vrot.slane %v844, 4
    %v846 = vmax.f32 %v844, %v845
    %v847 = vrot.slane %v846, 2
    %v848 = vmax.f32 %v846, %v847
    %v849 = vrot.slane %v848, 1
    %v850 = vmax.f32 %v848, %v849
    %v851 = vsel %vm808, %v755, -inf
    %v852 = vrot.slane %v851, 4
    %v853 = vmax.f32 %v851, %v852
    %v854 = vrot.slane %v853, 2
    %v855 = vmax.f32 %v853, %v854
    %v856 = vrot.slane %v855, 1
    %v857 = vmax.f32 %v855, %v856
    %v858 = vsel %vm808, %v757, -inf
    %v859 = vrot.slane %v858, 4
    %v860 = vmax.f32 %v858, %v859
    %v861 = vrot.slane %v860, 2
    %v862 = vmax.f32 %v860, %v861
    %v863 = vrot.slane %v862, 1
    %v864 = vmax.f32 %v862, %v863
    %v865 = vsel %vm808, %v765, -inf
    %v866 = vrot.slane %v865, 4
    %v867 = vmax.f32 %v865, %v866
    %v868 = vrot.slane %v867, 2
    %v869 = vmax.f32 %v867, %v868
    %v870 = vrot.slane %v869, 1
    %v871 = vmax.f32 %v869, %v870
    %v872 = vsel %vm808, %v773, -inf
    %v873 = vrot.slane %v872, 4
    %v874 = vmax.f32 %v872, %v873
    %v875 = vrot.slane %v874, 2
    %v876 = vmax.f32 %v874, %v875
    %v877 = vrot.slane %v876, 1
    %v878 = vmax.f32 %v876, %v877
    %v879 = vsel %vm808, %v772, -inf
    %v880 = vrot.slane %v879, 4
    %v881 = vmax.f32 %v879, %v880
    %v882 = vrot.slane %v881, 2
    %v883 = vmax.f32 %v881, %v882
    %v884 = vrot.slane %v883, 1
    %v885 = vmax.f32 %v883, %v884
    %v886 = vsel %vm808, %v774, -inf
    %v887 = vrot.slane %v886, 4
    %v888 = vmax.f32 %v886, %v887
    %v889 = vrot.slane %v888, 2
    %v890 = vmax.f32 %v888, %v889
    %v891 = vrot.slane %v890, 1
    %v892 = vmax.f32 %v890, %v891
    %v893 = vsel %vm808, %v782, -inf
    %v894 = vrot.slane %v893, 4
    %v895 = vmax.f32 %v893, %v894
    %v896 = vrot.slane %v895, 2
    %v897 = vmax.f32 %v895, %v896
    %v898 = vrot.slane %v897, 1
    %v899 = vmax.f32 %v897, %v898
    %v900 = vsel %vm808, %v790, -inf
    %v901 = vrot.slane %v900, 4
    %v902 = vmax.f32 %v900, %v901
    %v903 = vrot.slane %v902, 2
    %v904 = vmax.f32 %v902, %v903
    %v905 = vrot.slane %v904, 1
    %v906 = vmax.f32 %v904, %v905
    %v907 = vsel %vm808, %v789, -inf
    %v908 = vrot.slane %v907, 4
    %v909 = vmax.f32 %v907, %v908
    %v910 = vrot.slane %v909, 2
    %v911 = vmax.f32 %v909, %v910
    %v912 = vrot.slane %v911, 1
    %v913 = vmax.f32 %v911, %v912
    %v914 = vsel %vm808, %v791, -inf
    %v915 = vrot.slane %v914, 4
    %v916 = vmax.f32 %v914, %v915
    %v917 = vrot.slane %v916, 2
    %v918 = vmax.f32 %v916, %v917
    %v919 = vrot.slane %v918, 1
    %v920 = vmax.f32 %v918, %v919
    %v921 = vpack.c.bf16 %v815, %v815
    %v922 = vpack.c.bf16 %v822, %v822
    %v923 = vpack.c.bf16 %v829, %v829
    %v924 = vpack.c.bf16 %v836, %v836
    %v925 = vpack.c.bf16 %v843, %v843
    %v926 = vpack.c.bf16 %v850, %v850
    %v927 = vpack.c.bf16 %v857, %v857
    %v928 = vpack.c.bf16 %v864, %v864
    %v929 = vpack.c.bf16 %v871, %v871
    %v930 = vpack.c.bf16 %v878, %v878
    %v931 = vpack.c.bf16 %v885, %v885
    %v932 = vpack.c.bf16 %v892, %v892
    %v933 = vpack.c.bf16 %v899, %v899
    %v934 = vpack.c.bf16 %v906, %v906
    %v935 = vpack.c.bf16 %v913, %v913
    %v936 = vpack.c.bf16 %v920, %v920
    %v937 = vld [vmem:[#allocation8] sm:$0xff]
    %v938 = vld [vmem:[#allocation8 + $0x8] sm:$0xf]
    %v939 = vld [vmem:[#allocation8 + $0xc] sm:$0xff]
    %v940 = vld [vmem:[#allocation8 + $0x14] sm:$0xf]
    %v941 = vld [vmem:[#allocation8 + $0x18] sm:$0xff]
    %v942 = vld [vmem:[#allocation8 + $0x20] sm:$0xf]
    %v943 = vld [vmem:[#allocation8 + $0x24] sm:$0xff]
    %v944 = vld [vmem:[#allocation8 + $0x2c] sm:$0xf]
    %v945 = vld [vmem:[#allocation8 + $0x30] sm:$0xff]
    %v946 = vld [vmem:[#allocation8 + $0x38] sm:$0xf]
    %v947 = vld [vmem:[#allocation8 + $0x3c] sm:$0xff]
    %v948 = vld [vmem:[#allocation8 + $0x44] sm:$0xf]
    %v949 = vld [vmem:[#allocation8 + $0x48] sm:$0xff]
    %v950 = vld [vmem:[#allocation8 + $0x50] sm:$0xf]
    %v951 = vld [vmem:[#allocation8 + $0x54] sm:$0xff]
    %v952 = vld [vmem:[#allocation8 + $0x5c] sm:$0xf]
    %v953 = vld [vmem:[#allocation8 + $0x60] sm:$0xff]
    %v954 = vld [vmem:[#allocation8 + $0x68] sm:$0xf]
    %v955 = vld [vmem:[#allocation8 + $0x6c] sm:$0xff]
    %v956 = vld [vmem:[#allocation8 + $0x74] sm:$0xf]
    %v957 = vld [vmem:[#allocation8 + $0x78] sm:$0xff]
    %v958 = vld [vmem:[#allocation8 + $0x80] sm:$0xf]
    %v959 = vld [vmem:[#allocation8 + $0x84] sm:$0xff]
    %v960 = vld [vmem:[#allocation8 + $0x8c] sm:$0xf]
    %v961 = vld [vmem:[#allocation8 + $0x90] sm:$0xff]
    %v962 = vld [vmem:[#allocation8 + $0x98] sm:$0xf]
    %v963 = vld [vmem:[#allocation8 + $0x9c] sm:$0xff]
    %v964 = vld [vmem:[#allocation8 + $0xa4] sm:$0xf]
    %v965 = vld [vmem:[#allocation8 + $0xa8] sm:$0xff]
    %v966 = vld [vmem:[#allocation8 + $0xb0] sm:$0xf]
    %v967 = vld [vmem:[#allocation8 + $0xb4] sm:$0xff]
    %v968 = vld [vmem:[#allocation8 + $0xbc] sm:$0xf]
    %v985 = vunpack.c.l.b16 %v921
    %v986 = vunpack.c.l.b16 %v922
    %v987 = vunpack.c.l.b16 %v923
    %v988 = vunpack.c.l.b16 %v924
    %v989 = vunpack.c.l.b16 %v925
    %v990 = vunpack.c.l.b16 %v926
    %v991 = vunpack.c.l.b16 %v927
    %v992 = vunpack.c.l.b16 %v928
    %v993 = vunpack.c.l.b16 %v929
    %v994 = vunpack.c.l.b16 %v930
    %v995 = vunpack.c.l.b16 %v931
    %v996 = vunpack.c.l.b16 %v932
    %v997 = vunpack.c.l.b16 %v933
    %v998 = vunpack.c.l.b16 %v934
    %v999 = vunpack.c.l.b16 %v935
    %v1000 = vunpack.c.l.b16 %v936
    %vm1001 = vcmask 1041409
    %v1002 = vsel %vm1001, %v986, %v985
    %vm1003 = vcmask 1042434
    %v1004 = vsel %vm1003, %v987, %v1002
    %vm1005 = vcmask 1043459
    %v1006 = vsel %vm1005, %v988, %v1004
    %vm1007 = vcmask 1044484
    %v1008 = vsel %vm1007, %v989, %v1006
    %vm1009 = vcmask 1045509
    %v1010 = vsel %vm1009, %v990, %v1008
    %vm1011 = vcmask 1046534
    %v1012 = vsel %vm1011, %v991, %v1010
    %vm1013 = vcmask 1047559
    %v1014 = vsel %vm1013, %v992, %v1012
    %v1015 = vsel %vm1001, %v994, %v993
    %v1016 = vsel %vm1003, %v995, %v1015
    %v1017 = vsel %vm1005, %v996, %v1016
    %v1018 = vsel %vm1007, %v997, %v1017
    %v1019 = vsel %vm1009, %v998, %v1018
    %v1020 = vsel %vm1011, %v999, %v1019
    %v1021 = vsel %vm1013, %v1000, %v1020
    %v1022 = vpack.c.b16 %v1021, %v1014
    %v1056 = vunpack.c.l.b16 %v937
    %v1057 = vunpack.c.h.b16 %v937
    %v1058 = vunpack.c.l.b16 %v938
    %v1059 = vunpack.c.l.b16 %v939
    %v1060 = vunpack.c.h.b16 %v939
    %v1061 = vunpack.c.l.b16 %v940
    %v1062 = vunpack.c.l.b16 %v941
    %v1063 = vunpack.c.h.b16 %v941
    %v1064 = vunpack.c.l.b16 %v942
    %v1065 = vunpack.c.l.b16 %v943
    %v1066 = vunpack.c.h.b16 %v943
    %v1067 = vunpack.c.l.b16 %v944
    %v1068 = vunpack.c.l.b16 %v945
    %v1069 = vunpack.c.h.b16 %v945
    %v1070 = vunpack.c.l.b16 %v946
    %v1071 = vunpack.c.l.b16 %v947
    %v1072 = vunpack.c.h.b16 %v947
    %v1073 = vunpack.c.l.b16 %v948
    %v1074 = vunpack.c.l.b16 %v949
    %v1075 = vunpack.c.h.b16 %v949
    %v1076 = vunpack.c.l.b16 %v950
    %v1077 = vunpack.c.l.b16 %v951
    %v1078 = vunpack.c.h.b16 %v951
    %v1079 = vunpack.c.l.b16 %v952
    %v1080 = vunpack.c.l.b16 %v953
    %v1081 = vunpack.c.h.b16 %v953
    %v1082 = vunpack.c.l.b16 %v954
    %v1083 = vunpack.c.l.b16 %v955
    %v1084 = vunpack.c.h.b16 %v955
    %v1085 = vunpack.c.l.b16 %v956
    %v1086 = vunpack.c.l.b16 %v957
    %v1087 = vunpack.c.h.b16 %v957
    %v1088 = vunpack.c.l.b16 %v958
    %v1089 = vunpack.c.l.b16 %v959
    %v1090 = vunpack.c.h.b16 %v959
    %v1091 = vunpack.c.l.b16 %v960
    %v1092 = vunpack.c.l.b16 %v961
    %v1093 = vunpack.c.h.b16 %v961
    %v1094 = vunpack.c.l.b16 %v962
    %v1095 = vunpack.c.l.b16 %v963
    %v1096 = vunpack.c.h.b16 %v963
    %v1097 = vunpack.c.l.b16 %v964
    %v1098 = vunpack.c.l.b16 %v965
    %v1099 = vunpack.c.h.b16 %v965
    %v1100 = vunpack.c.l.b16 %v966
    %v1101 = vunpack.c.l.b16 %v967
    %v1102 = vunpack.c.h.b16 %v967
    %v1103 = vunpack.c.l.b16 %v968
    %v1104 = vpack.c.b16 %v1059, %v1056
    %v1105 = vpack.c.b16 %v1060, %v1057
    %v1106 = vpack.c.b16 %v1061, %v1058
    %v1107 = vpack.c.b16 %v1065, %v1062
    %v1108 = vpack.c.b16 %v1066, %v1063
    %v1109 = vpack.c.b16 %v1067, %v1064
    %v1110 = vpack.c.b16 %v1071, %v1068
    %v1111 = vpack.c.b16 %v1072, %v1069
    %v1112 = vpack.c.b16 %v1073, %v1070
    %v1113 = vpack.c.b16 %v1077, %v1074
    %v1114 = vpack.c.b16 %v1078, %v1075
    %v1115 = vpack.c.b16 %v1079, %v1076
    %v1116 = vpack.c.b16 %v1083, %v1080
    %v1117 = vpack.c.b16 %v1084, %v1081
    %v1118 = vpack.c.b16 %v1085, %v1082
    %v1119 = vpack.c.b16 %v1089, %v1086
    %v1120 = vpack.c.b16 %v1090, %v1087
    %v1121 = vpack.c.b16 %v1091, %v1088
    %v1122 = vpack.c.b16 %v1095, %v1092
    %v1123 = vpack.c.b16 %v1096, %v1093
    %v1124 = vpack.c.b16 %v1097, %v1094
    %v1125 = vpack.c.b16 %v1101, %v1098
    %v1126 = vpack.c.b16 %v1102, %v1099
    %v1127 = vpack.c.b16 %v1103, %v1100
    %1152 = vmatprep.subr.bf16.mxu0 %v1105
    %1153 = vmatpush1.bf16.msra.mxu0 %v1104
    %1154 = vmatprep.subr.bf16.mxu0 %v1108
    %1155 = vmatpush1.bf16.msra.mxu0 %v1107
    %1156 = vmatprep.subr.bf16.mxu0 %v1111
    %1157 = vmatpush1.bf16.msra.mxu0 %v1110
    %1158 = vmatprep.subr.bf16.mxu0 %v1114
    %1159 = vmatpush1.bf16.msra.mxu0 %v1113
    %1160 = vmatprep.subr.bf16.mxu0 %v1117
    %1161 = vmatpush1.bf16.msra.mxu0 %v1116
    %1162 = vmatprep.subr.bf16.mxu0 %v1120
    %1163 = vmatpush1.bf16.msra.mxu0 %v1119
    %1164 = vmatprep.subr.bf16.mxu0 %v1123
    %1165 = vmatpush1.bf16.msra.mxu0 %v1122
    %1166 = vmatprep.subr.bf16.mxu0 %v1126
    %1167 = vmatpush1.bf16.msra.mxu0 %v1125
    %1168 = vmatprep.subr.bf16.mxu0 0
    %1169 = vmatpush1.bf16.msra.mxu0 0
    %1170 = vmatprep.subr.bf16.mxu0 0
    %1171 = vmatpush1.bf16.msra.mxu0 0
    %1172 = vmatprep.subr.bf16.mxu0 0
    %1173 = vmatpush1.bf16.msra.mxu0 0
    %1174 = vmatprep.subr.bf16.mxu0 0
    %1175 = vmatpush1.bf16.msra.mxu0 0
    %1176 = vmatprep.subr.bf16.mxu0 0
    %1177 = vmatpush1.bf16.msra.mxu0 0
    %1178 = vmatprep.subr.bf16.mxu0 0
    %1179 = vmatpush1.bf16.msra.mxu0 0
    %1180 = vmatprep.subr.bf16.mxu0 0
    %1181 = vmatpush1.bf16.msra.mxu0 0
    %1182 = vmatprep.subr.bf16.mxu0 0
    %1183 = vmatpush1.bf16.msra.mxu0 0
    %1184 = vmatprep.mubr.bf16.mxu0 0
    %1185 = vmatmul.mubr.bf16.gmra.mrb[0].mxu0 %v1022
    %v1186 = vpop.f32.mrb[0].mxu0
    %v1187 = vadd.f32 0.0, %v1186
    %v1188 = vpop.f32.mrb[0].mxu0
    %v1189 = vadd.f32 0.0, %v1188
    %v1190 = vpop.f32.mrb[0].mxu0
    %v1191 = vadd.f32 0.0, %v1190
    %v1192 = vpop.f32.mrb[0].mxu0
    %v1193 = vadd.f32 0.0, %v1192
    %1194 = vdwg.mxu0
    %1195 = vmatprep.subr.bf16.mxu0 0
    %1196 = vmatpush1.bf16.msra.mxu0 %v1106
    %1197 = vmatprep.subr.bf16.mxu0 0
    %1198 = vmatpush1.bf16.msra.mxu0 %v1109
    %1199 = vmatprep.subr.bf16.mxu0 0
    %1200 = vmatpush1.bf16.msra.mxu0 %v1112
    %1201 = vmatprep.subr.bf16.mxu0 0
    %1202 = vmatpush1.bf16.msra.mxu0 %v1115
    %1203 = vmatprep.subr.bf16.mxu0 0
    %1204 = vmatpush1.bf16.msra.mxu0 %v1118
    %1205 = vmatprep.subr.bf16.mxu0 0
    %1206 = vmatpush1.bf16.msra.mxu0 %v1121
    %1207 = vmatprep.subr.bf16.mxu0 0
    %1208 = vmatpush1.bf16.msra.mxu0 %v1124
    %1209 = vmatprep.subr.bf16.mxu0 0
    %1210 = vmatpush1.bf16.msra.mxu0 %v1127
    %1211 = vmatprep.subr.bf16.mxu0 0
    %1212 = vmatpush1.bf16.msra.mxu0 0
    %1213 = vmatprep.subr.bf16.mxu0 0
    %1214 = vmatpush1.bf16.msra.mxu0 0
    %1215 = vmatprep.subr.bf16.mxu0 0
    %1216 = vmatpush1.bf16.msra.mxu0 0
    %1217 = vmatprep.subr.bf16.mxu0 0
    %1218 = vmatpush1.bf16.msra.mxu0 0
    %1219 = vmatprep.subr.bf16.mxu0 0
    %1220 = vmatpush1.bf16.msra.mxu0 0
    %1221 = vmatprep.subr.bf16.mxu0 0
    %1222 = vmatpush1.bf16.msra.mxu0 0
    %1223 = vmatprep.subr.bf16.mxu0 0
    %1224 = vmatpush1.bf16.msra.mxu0 0
    %1225 = vmatprep.subr.bf16.mxu0 0
    %1226 = vmatpush1.bf16.msra.mxu0 0
    %1227 = vmatprep.mubr.bf16.mxu0 0
    %1228 = vmatmul.mubr.bf16.gmra.mrb[0].mxu0 %v1022
    %v1229 = vpop.f32.mrb[0].mxu0
    %v1230 = vadd.f32 0.0, %v1229
    %v1231 = vpop.f32.mrb[0].mxu0
    %v1232 = vpop.f32.mrb[0].mxu0
    %v1233 = vadd.f32 0.0, %v1232
    %v1234 = vpop.f32.mrb[0].mxu0
    %1235 = vdwg.mxu0
    %vm1236 = vcmp.lt.s32.totalorder %v595, 0
    %v1237 = vsub.s32 0, %v595
    %v1238 = vsel %vm1236, %v1237, %v595
    %v1239 = vshrl.u32 %v1238, 3
    %v1240 = vand.u32 %v1238, 7
    %v1241 = vsub.s32 0, %v1240
    %v1242 = vsel %vm1236, %v1241, %v1240
    %vm1243 = vcmp.lt.s32.totalorder %v596, 0
    %v1244 = vsub.s32 0, %v596
    %v1245 = vsel %vm1243, %v1244, %v596
    %v1246 = vshrl.u32 %v1245, 3
    %v1247 = vand.u32 %v1245, 7
    %v1248 = vsub.s32 0, %v1247
    %v1249 = vsel %vm1243, %v1248, %v1247
    %vm1250 = vcmp.ne.s32.totalorder %v1242, 0
    %vm1251 = vcmp.ne.s32.totalorder %v1249, 0
    %vm1252 = vcmp.lt.s32.totalorder %v1242, 0
    %vm1253 = vcmp.lt.s32.totalorder %v1249, 0
    %vm1254 = vmand %vm1252, %vm1250
    %vm1255 = vmand %vm1253, %vm1251
    %v1256 = vadd.s32 %v1242, 8
    %v1257 = vadd.s32 %v1249, 8
    %v1258 = vsel %vm1254, %v1256, %v1242
    %v1259 = vsel %vm1255, %v1257, %v1249
    %v1260 = vld [vmem:[#allocation10] sm:$0x1]
    %v1262 = vlaneseq
    %v1263 = vshrl.u32 %v1262, 7
    %v1264 = vsub.s32 0, %v1263
    %v1265 = vrot.slane %v1260, %v1264
    %v1267 = vadd.f32 %v1189, %v1265
    %v1268 = vadd.f32 %v1193, %v1265
    %vm1269 = vcmp.eq.s32.totalorder %v1258, 0
    %vm1270 = vcmp.eq.s32.totalorder %v1259, 0
    %v1271 = vrot.slane %v1187, 7
    %v1272 = vrot.slane %v1191, 7
    %v1273 = vsel %vm666, %v1271, %v1272
    %v1274 = vsel %vm666, %v1272, %v1271
    %v1275 = vsel %vm1269, 1, 0
    %v1276 = vsel %vm1270, 1, 0
    %vm1277 = vcmp.eq.s32.totalorder %v1275, 1
    %vm1278 = vcmp.eq.s32.totalorder %v1276, 1
    %v1279 = vsel %vm1277, 0.0, %v1274
    %v1280 = vsel %vm1278, 0.0, %v1273
    %v1281 = vadd.f32 %v1267, %v1279
    %v1282 = vadd.f32 %v1268, %v1280
    %vm1283 = vcmp.eq.s32.totalorder %v1258, 7
    %vm1284 = vcmp.eq.s32.totalorder %v1259, 7
    %v1285 = vrot.slane %v1230, 1
    %v1286 = vrot.slane %v1233, 1
    %v1287 = vsel %vm695, %v1285, %v1286
    %v1288 = vsel %vm695, %v1286, %v1285
    %v1289 = vsel %vm1283, 1, 0
    %v1290 = vsel %vm1284, 1, 0
    %vm1291 = vcmp.eq.s32.totalorder %v1289, 1
    %vm1292 = vcmp.eq.s32.totalorder %v1290, 1
    %v1293 = vsel %vm1291, 0.0, %v1287
    %v1294 = vsel %vm1292, 0.0, %v1288
    %v1295 = vadd.f32 %v1281, %v1293
    %v1296 = vadd.f32 %v1282, %v1294
    %v1297 = vmax.f32 %v1295, 0.0
    %v1298 = vmax.f32 %v1296, 0.0
    %v1301 = vcombine.high %v1297, %v1297
    %v1303 = vunpack.c.l.s4 1983009808
    %v1304 = vunpack.c.0.s8 %v1303
    %v1305 = vlaneseq
    %v1306 = vshrl.u32 %v1305, 7
    %v1307 = vsub.s32 %v1304, %v1306
    %v1308 = vrot.slane %v1297, %v1307
    %v1310 = vunpack.c.l.s4 1983009808
    %v1311 = vunpack.c.0.s8 %v1310
    %v1312 = vlaneseq
    %v1313 = vshrl.u32 %v1312, 7
    %v1314 = vsub.s32 %v1311, %v1313
    %v1315 = vrot.slane %v1301, %v1314
    %v1316 = vcombine.high %v1308, %v1308
    %v1317 = vcombine.high %v1315, %v1315
    %v1318 = vcombine.high %v1298, %v1298
    %v1320 = vunpack.c.l.s4 1983009808
    %v1321 = vunpack.c.0.s8 %v1320
    %v1322 = vlaneseq
    %v1323 = vshrl.u32 %v1322, 7
    %v1324 = vsub.s32 %v1321, %v1323
    %v1325 = vrot.slane %v1298, %v1324
    %v1327 = vunpack.c.l.s4 1983009808
    %v1328 = vunpack.c.0.s8 %v1327
    %v1329 = vlaneseq
    %v1330 = vshrl.u32 %v1329, 7
    %v1331 = vsub.s32 %v1328, %v1330
    %v1332 = vrot.slane %v1318, %v1331
    %v1333 = vcombine.high %v1325, %v1325
    %v1334 = vcombine.high %v1332, %v1332
    %v1343 = vsel %vm808, %v1308, -inf
    %v1344 = vrot.slane %v1343, 4
    %v1345 = vmax.f32 %v1343, %v1344
    %v1346 = vrot.slane %v1345, 2
    %v1347 = vmax.f32 %v1345, %v1346
    %v1348 = vrot.slane %v1347, 1
    %v1349 = vmax.f32 %v1347, %v1348
    %v1350 = vsel %vm808, %v1316, -inf
    %v1351 = vrot.slane %v1350, 4
    %v1352 = vmax.f32 %v1350, %v1351
    %v1353 = vrot.slane %v1352, 2
    %v1354 = vmax.f32 %v1352, %v1353
    %v1355 = vrot.slane %v1354, 1
    %v1356 = vmax.f32 %v1354, %v1355
    %v1357 = vsel %vm808, %v1315, -inf
    %v1358 = vrot.slane %v1357, 4
    %v1359 = vmax.f32 %v1357, %v1358
    %v1360 = vrot.slane %v1359, 2
    %v1361 = vmax.f32 %v1359, %v1360
    %v1362 = vrot.slane %v1361, 1
    %v1363 = vmax.f32 %v1361, %v1362
    %v1364 = vsel %vm808, %v1317, -inf
    %v1365 = vrot.slane %v1364, 4
    %v1366 = vmax.f32 %v1364, %v1365
    %v1367 = vrot.slane %v1366, 2
    %v1368 = vmax.f32 %v1366, %v1367
    %v1369 = vrot.slane %v1368, 1
    %v1370 = vmax.f32 %v1368, %v1369
    %v1371 = vsel %vm808, %v1325, -inf
    %v1372 = vrot.slane %v1371, 4
    %v1373 = vmax.f32 %v1371, %v1372
    %v1374 = vrot.slane %v1373, 2
    %v1375 = vmax.f32 %v1373, %v1374
    %v1376 = vrot.slane %v1375, 1
    %v1377 = vmax.f32 %v1375, %v1376
    %v1378 = vsel %vm808, %v1333, -inf
    %v1379 = vrot.slane %v1378, 4
    %v1380 = vmax.f32 %v1378, %v1379
    %v1381 = vrot.slane %v1380, 2
    %v1382 = vmax.f32 %v1380, %v1381
    %v1383 = vrot.slane %v1382, 1
    %v1384 = vmax.f32 %v1382, %v1383
    %v1385 = vsel %vm808, %v1332, -inf
    %v1386 = vrot.slane %v1385, 4
    %v1387 = vmax.f32 %v1385, %v1386
    %v1388 = vrot.slane %v1387, 2
    %v1389 = vmax.f32 %v1387, %v1388
    %v1390 = vrot.slane %v1389, 1
    %v1391 = vmax.f32 %v1389, %v1390
    %v1392 = vsel %vm808, %v1334, -inf
    %v1393 = vrot.slane %v1392, 4
    %v1394 = vmax.f32 %v1392, %v1393
    %v1395 = vrot.slane %v1394, 2
    %v1396 = vmax.f32 %v1394, %v1395
    %v1397 = vrot.slane %v1396, 1
    %v1398 = vmax.f32 %v1396, %v1397
    %v1399 = vpack.c.bf16 %v1349, %v1349
    %v1400 = vpack.c.bf16 %v1356, %v1356
    %v1401 = vpack.c.bf16 %v1363, %v1363
    %v1402 = vpack.c.bf16 %v1370, %v1370
    %v1403 = vpack.c.bf16 %v1377, %v1377
    %v1404 = vpack.c.bf16 %v1384, %v1384
    %v1405 = vpack.c.bf16 %v1391, %v1391
    %v1406 = vpack.c.bf16 %v1398, %v1398
    %v1407 = vld [vmem:[#allocation11] sm:$0xff]
    %v1408 = vld [vmem:[#allocation11 + $0x8] sm:$0xff]
    %v1409 = vld [vmem:[#allocation11 + $0x10] sm:$0xff]
    %v1410 = vld [vmem:[#allocation11 + $0x18] sm:$0xff]
    %v1411 = vld [vmem:[#allocation11 + $0x20] sm:$0xff]
    %v1412 = vld [vmem:[#allocation11 + $0x28] sm:$0xff]
    %v1413 = vld [vmem:[#allocation11 + $0x30] sm:$0xff]
    %v1414 = vld [vmem:[#allocation11 + $0x38] sm:$0xff]
    %v1415 = vld [vmem:[#allocation11 + $0x40] sm:$0xff]
    %v1416 = vld [vmem:[#allocation11 + $0x48] sm:$0xff]
    %v1417 = vld [vmem:[#allocation11 + $0x50] sm:$0xff]
    %v1418 = vld [vmem:[#allocation11 + $0x58] sm:$0xff]
    %v1419 = vld [vmem:[#allocation11 + $0x60] sm:$0xff]
    %v1420 = vld [vmem:[#allocation11 + $0x68] sm:$0xff]
    %v1421 = vld [vmem:[#allocation11 + $0x70] sm:$0xff]
    %v1422 = vld [vmem:[#allocation11 + $0x78] sm:$0xff]
    %v1423 = vld [vmem:[#allocation13] sm:$0x3]
    %v1425 = vlaneseq
    %v1426 = vshrl.u32 %v1425, 7
    %v1427 = vsub.s32 0, %v1426
    %v1428 = vrot.slane %v1423, %v1427
    %v1429 = vlaneseq
    %v1430 = vshrl.u32 %v1429, 7
    %v1431 = vsub.s32 1, %v1430
    %v1432 = vrot.slane %v1423, %v1431
    %v1443 = vunpack.c.l.b16 %v1399
    %v1444 = vunpack.c.l.b16 %v1400
    %v1445 = vunpack.c.l.b16 %v1401
    %v1446 = vunpack.c.l.b16 %v1402
    %v1447 = vunpack.c.l.b16 %v1403
    %v1448 = vunpack.c.l.b16 %v1404
    %v1449 = vunpack.c.l.b16 %v1405
    %v1450 = vunpack.c.l.b16 %v1406
    %v1451 = vsel %vm1001, %v1444, %v1443
    %v1452 = vsel %vm1003, %v1445, %v1451
    %v1453 = vsel %vm1005, %v1446, %v1452
    %v1454 = vsel %vm1007, %v1447, %v1453
    %v1455 = vsel %vm1009, %v1448, %v1454
    %v1456 = vsel %vm1011, %v1449, %v1455
    %v1457 = vsel %vm1013, %v1450, %v1456
    %v1458 = vpack.c.b16 %v1457, %v1457
    %v1476 = vunpack.c.l.b16 %v1407
    %v1477 = vunpack.c.h.b16 %v1407
    %v1478 = vunpack.c.l.b16 %v1408
    %v1479 = vunpack.c.h.b16 %v1408
    %v1480 = vunpack.c.l.b16 %v1409
    %v1481 = vunpack.c.h.b16 %v1409
    %v1482 = vunpack.c.l.b16 %v1410
    %v1483 = vunpack.c.h.b16 %v1410
    %v1484 = vunpack.c.l.b16 %v1411
    %v1485 = vunpack.c.h.b16 %v1411
    %v1486 = vunpack.c.l.b16 %v1412
    %v1487 = vunpack.c.h.b16 %v1412
    %v1488 = vunpack.c.l.b16 %v1413
    %v1489 = vunpack.c.h.b16 %v1413
    %v1490 = vunpack.c.l.b16 %v1414
    %v1491 = vunpack.c.h.b16 %v1414
    %v1492 = vunpack.c.l.b16 %v1415
    %v1493 = vunpack.c.h.b16 %v1415
    %v1494 = vunpack.c.l.b16 %v1416
    %v1495 = vunpack.c.h.b16 %v1416
    %v1496 = vunpack.c.l.b16 %v1417
    %v1497 = vunpack.c.h.b16 %v1417
    %v1498 = vunpack.c.l.b16 %v1418
    %v1499 = vunpack.c.h.b16 %v1418
    %v1500 = vunpack.c.l.b16 %v1419
    %v1501 = vunpack.c.h.b16 %v1419
    %v1502 = vunpack.c.l.b16 %v1420
    %v1503 = vunpack.c.h.b16 %v1420
    %v1504 = vunpack.c.l.b16 %v1421
    %v1505 = vunpack.c.h.b16 %v1421
    %v1506 = vunpack.c.l.b16 %v1422
    %v1507 = vunpack.c.h.b16 %v1422
    %v1508 = vpack.c.b16 %v1478, %v1476
    %v1509 = vpack.c.b16 %v1479, %v1477
    %v1510 = vpack.c.b16 %v1482, %v1480
    %v1511 = vpack.c.b16 %v1483, %v1481
    %v1512 = vpack.c.b16 %v1486, %v1484
    %v1513 = vpack.c.b16 %v1487, %v1485
    %v1514 = vpack.c.b16 %v1490, %v1488
    %v1515 = vpack.c.b16 %v1491, %v1489
    %v1516 = vpack.c.b16 %v1494, %v1492
    %v1517 = vpack.c.b16 %v1495, %v1493
    %v1518 = vpack.c.b16 %v1498, %v1496
    %v1519 = vpack.c.b16 %v1499, %v1497
    %v1520 = vpack.c.b16 %v1502, %v1500
    %v1521 = vpack.c.b16 %v1503, %v1501
    %v1522 = vpack.c.b16 %v1506, %v1504
    %v1523 = vpack.c.b16 %v1507, %v1505
    %1540 = vmatprep.subr.bf16.mxu0 %v1509
    %1541 = vmatpush1.bf16.msra.mxu0 %v1508
    %1542 = vmatprep.subr.bf16.mxu0 %v1511
    %1543 = vmatpush1.bf16.msra.mxu0 %v1510
    %1544 = vmatprep.subr.bf16.mxu0 %v1513
    %1545 = vmatpush1.bf16.msra.mxu0 %v1512
    %1546 = vmatprep.subr.bf16.mxu0 %v1515
    %1547 = vmatpush1.bf16.msra.mxu0 %v1514
    %1548 = vmatprep.subr.bf16.mxu0 %v1517
    %1549 = vmatpush1.bf16.msra.mxu0 %v1516
    %1550 = vmatprep.subr.bf16.mxu0 %v1519
    %1551 = vmatpush1.bf16.msra.mxu0 %v1518
    %1552 = vmatprep.subr.bf16.mxu0 %v1521
    %1553 = vmatpush1.bf16.msra.mxu0 %v1520
    %1554 = vmatprep.subr.bf16.mxu0 %v1523
    %1555 = vmatpush1.bf16.msra.mxu0 %v1522
    %1556 = vmatprep.subr.bf16.mxu0 0
    %1557 = vmatpush1.bf16.msra.mxu0 0
    %1558 = vmatprep.subr.bf16.mxu0 0
    %1559 = vmatpush1.bf16.msra.mxu0 0
    %1560 = vmatprep.subr.bf16.mxu0 0
    %1561 = vmatpush1.bf16.msra.mxu0 0
    %1562 = vmatprep.subr.bf16.mxu0 0
    %1563 = vmatpush1.bf16.msra.mxu0 0
    %1564 = vmatprep.subr.bf16.mxu0 0
    %1565 = vmatpush1.bf16.msra.mxu0 0
    %1566 = vmatprep.subr.bf16.mxu0 0
    %1567 = vmatpush1.bf16.msra.mxu0 0
    %1568 = vmatprep.subr.bf16.mxu0 0
    %1569 = vmatpush1.bf16.msra.mxu0 0
    %1570 = vmatprep.subr.bf16.mxu0 0
    %1571 = vmatpush1.bf16.msra.mxu0 0
    %1572 = vmatprep.mubr.bf16.mxu0 0
    %1573 = vmatmul.mubr.bf16.gmra.mrb[0].mxu0 %v1458
    %v1574 = vpop.f32.mrb[0].mxu0
    %v1575 = vadd.f32 %v1428, %v1574
    %v1576 = vpop.f32.mrb[0].mxu0
    %v1577 = vadd.f32 %v1432, %v1576
    %v1578 = vpop.f32.mrb[0].mxu0
    %v1579 = vpop.f32.mrb[0].mxu0
    %1580 = vdwg.mxu0
    %v1581 = vmax.f32 %v1575, 0.0
    %v1582 = vmax.f32 %v1577, 0.0
    %v1583 = vpack.c.bf16 %v1581, %v1581
    %v1584 = vpack.c.bf16 %v1582, %v1582
    %v1585 = vld [vmem:[#allocation14] sm:$0xff]
    %v1586 = vld [vmem:[#allocation14 + $0x8] sm:$0xff]
    %v1587 = vld [vmem:[#allocation14 + $0x10] sm:$0xff]
    %v1588 = vld [vmem:[#allocation14 + $0x18] sm:$0xff]
    %v1589 = vld [vmem:[#allocation14 + $0x20] sm:$0xff]
    %v1590 = vld [vmem:[#allocation14 + $0x28] sm:$0xff]
    %v1591 = vld [vmem:[#allocation14 + $0x30] sm:$0xff]
    %v1592 = vld [vmem:[#allocation14 + $0x38] sm:$0xff]
    %v1593 = vld [vmem:[#allocation14 + $0x40] sm:$0xff]
    %v1594 = vld [vmem:[#allocation14 + $0x48] sm:$0xff]
    %v1595 = vld [vmem:[#allocation14 + $0x50] sm:$0xff]
    %v1596 = vld [vmem:[#allocation14 + $0x58] sm:$0xff]
    %v1597 = vld [vmem:[#allocation14 + $0x60] sm:$0xff]
    %v1598 = vld [vmem:[#allocation14 + $0x68] sm:$0xff]
    %v1599 = vld [vmem:[#allocation14 + $0x70] sm:$0xff]
    %v1600 = vld [vmem:[#allocation14 + $0x78] sm:$0xff]
    %v1601 = vld [vmem:[#allocation14 + $0x80] sm:$0xff]
    %v1602 = vld [vmem:[#allocation14 + $0x88] sm:$0xff]
    %v1603 = vld [vmem:[#allocation14 + $0x90] sm:$0xff]
    %v1604 = vld [vmem:[#allocation14 + $0x98] sm:$0xff]
    %v1605 = vld [vmem:[#allocation14 + $0xa0] sm:$0xff]
    %v1606 = vld [vmem:[#allocation14 + $0xa8] sm:$0xff]
    %v1607 = vld [vmem:[#allocation14 + $0xb0] sm:$0xff]
    %v1608 = vld [vmem:[#allocation14 + $0xb8] sm:$0xff]
    %v1609 = vld [vmem:[#allocation14 + $0xc0] sm:$0xff]
    %v1610 = vld [vmem:[#allocation14 + $0xc8] sm:$0xff]
    %v1611 = vld [vmem:[#allocation14 + $0xd0] sm:$0xff]
    %v1612 = vld [vmem:[#allocation14 + $0xd8] sm:$0xff]
    %v1613 = vld [vmem:[#allocation14 + $0xe0] sm:$0xff]
    %v1614 = vld [vmem:[#allocation14 + $0xe8] sm:$0xff]
    %v1615 = vld [vmem:[#allocation14 + $0xf0] sm:$0xff]
    %v1616 = vld [vmem:[#allocation14 + $0xf8] sm:$0xff]
    %v1617 = vld [vmem:[#allocation14 + $0x100] sm:$0xff]
    %v1618 = vld [vmem:[#allocation14 + $0x108] sm:$0xff]
    %v1619 = vld [vmem:[#allocation14 + $0x110] sm:$0xff]
    %v1620 = vld [vmem:[#allocation14 + $0x118] sm:$0xff]
    %v1621 = vld [vmem:[#allocation14 + $0x120] sm:$0xff]
    %v1622 = vld [vmem:[#allocation14 + $0x128] sm:$0xff]
    %v1623 = vld [vmem:[#allocation14 + $0x130] sm:$0xff]
    %v1624 = vld [vmem:[#allocation14 + $0x138] sm:$0xff]
    %v1625 = vld [vmem:[#allocation14 + $0x140] sm:$0xff]
    %v1626 = vld [vmem:[#allocation14 + $0x148] sm:$0xff]
    %v1627 = vld [vmem:[#allocation14 + $0x150] sm:$0xff]
    %v1628 = vld [vmem:[#allocation14 + $0x158] sm:$0xff]
    %v1629 = vld [vmem:[#allocation14 + $0x160] sm:$0xff]
    %v1630 = vld [vmem:[#allocation14 + $0x168] sm:$0xff]
    %v1631 = vld [vmem:[#allocation14 + $0x170] sm:$0xff]
    %v1632 = vld [vmem:[#allocation14 + $0x178] sm:$0xff]
    %v1633 = vld [vmem:[#allocation14 + $0x180] sm:$0xff]
    %v1634 = vld [vmem:[#allocation14 + $0x188] sm:$0xff]
    %v1635 = vld [vmem:[#allocation14 + $0x190] sm:$0xff]
    %v1636 = vld [vmem:[#allocation14 + $0x198] sm:$0xff]
    %v1637 = vld [vmem:[#allocation14 + $0x1a0] sm:$0xff]
    %v1638 = vld [vmem:[#allocation14 + $0x1a8] sm:$0xff]
    %v1639 = vld [vmem:[#allocation14 + $0x1b0] sm:$0xff]
    %v1640 = vld [vmem:[#allocation14 + $0x1b8] sm:$0xff]
    %v1641 = vld [vmem:[#allocation14 + $0x1c0] sm:$0xff]
    %v1642 = vld [vmem:[#allocation14 + $0x1c8] sm:$0xff]
    %v1643 = vld [vmem:[#allocation14 + $0x1d0] sm:$0xff]
    %v1644 = vld [vmem:[#allocation14 + $0x1d8] sm:$0xff]
    %v1645 = vld [vmem:[#allocation14 + $0x1e0] sm:$0xff]
    %v1646 = vld [vmem:[#allocation14 + $0x1e8] sm:$0xff]
    %v1647 = vld [vmem:[#allocation14 + $0x1f0] sm:$0xff]
    %v1648 = vld [vmem:[#allocation14 + $0x1f8] sm:$0xff]
    %v1649 = vld [vmem:[#allocation14 + $0x200] sm:$0xff]
    %v1650 = vld [vmem:[#allocation14 + $0x208] sm:$0xff]
    %v1651 = vld [vmem:[#allocation14 + $0x210] sm:$0xff]
    %v1652 = vld [vmem:[#allocation14 + $0x218] sm:$0xff]
    %v1653 = vld [vmem:[#allocation14 + $0x220] sm:$0xff]
    %v1654 = vld [vmem:[#allocation14 + $0x228] sm:$0xff]
    %v1655 = vld [vmem:[#allocation14 + $0x230] sm:$0xff]
    %v1656 = vld [vmem:[#allocation14 + $0x238] sm:$0xff]
    %v1657 = vld [vmem:[#allocation14 + $0x240] sm:$0xff]
    %v1658 = vld [vmem:[#allocation14 + $0x248] sm:$0xff]
    %v1659 = vld [vmem:[#allocation14 + $0x250] sm:$0xff]
    %v1660 = vld [vmem:[#allocation14 + $0x258] sm:$0xff]
    %v1661 = vld [vmem:[#allocation14 + $0x260] sm:$0xff]
    %v1662 = vld [vmem:[#allocation14 + $0x268] sm:$0xff]
    %v1663 = vld [vmem:[#allocation14 + $0x270] sm:$0xff]
    %v1664 = vld [vmem:[#allocation14 + $0x278] sm:$0xff]
    %v1665 = vld [vmem:[#allocation14 + $0x280] sm:$0xff]
    %v1666 = vld [vmem:[#allocation14 + $0x288] sm:$0xff]
    %v1667 = vld [vmem:[#allocation14 + $0x290] sm:$0xff]
    %v1668 = vld [vmem:[#allocation14 + $0x298] sm:$0xff]
    %v1669 = vld [vmem:[#allocation14 + $0x2a0] sm:$0xff]
    %v1670 = vld [vmem:[#allocation14 + $0x2a8] sm:$0xff]
    %v1671 = vld [vmem:[#allocation14 + $0x2b0] sm:$0xff]
    %v1672 = vld [vmem:[#allocation14 + $0x2b8] sm:$0xff]
    %v1673 = vld [vmem:[#allocation14 + $0x2c0] sm:$0xff]
    %v1674 = vld [vmem:[#allocation14 + $0x2c8] sm:$0xff]
    %v1675 = vld [vmem:[#allocation14 + $0x2d0] sm:$0xff]
    %v1676 = vld [vmem:[#allocation14 + $0x2d8] sm:$0xff]
    %v1677 = vld [vmem:[#allocation14 + $0x2e0] sm:$0xff]
    %v1678 = vld [vmem:[#allocation14 + $0x2e8] sm:$0xff]
    %v1679 = vld [vmem:[#allocation14 + $0x2f0] sm:$0xff]
    %v1680 = vld [vmem:[#allocation14 + $0x2f8] sm:$0xff]
    %v1681 = vld [vmem:[#allocation14 + $0x300] sm:$0xff]
    %v1682 = vld [vmem:[#allocation14 + $0x308] sm:$0xff]
    %v1683 = vld [vmem:[#allocation14 + $0x310] sm:$0xff]
    %v1684 = vld [vmem:[#allocation14 + $0x318] sm:$0xff]
    %v1685 = vld [vmem:[#allocation14 + $0x320] sm:$0xff]
    %v1686 = vld [vmem:[#allocation14 + $0x328] sm:$0xff]
    %v1687 = vld [vmem:[#allocation14 + $0x330] sm:$0xff]
    %v1688 = vld [vmem:[#allocation14 + $0x338] sm:$0xff]
    %v1689 = vld [vmem:[#allocation14 + $0x340] sm:$0xff]
    %v1690 = vld [vmem:[#allocation14 + $0x348] sm:$0xff]
    %v1691 = vld [vmem:[#allocation14 + $0x350] sm:$0xff]
    %v1692 = vld [vmem:[#allocation14 + $0x358] sm:$0xff]
    %v1693 = vld [vmem:[#allocation14 + $0x360] sm:$0xff]
    %v1694 = vld [vmem:[#allocation14 + $0x368] sm:$0xff]
    %v1695 = vld [vmem:[#allocation14 + $0x370] sm:$0xff]
    %v1696 = vld [vmem:[#allocation14 + $0x378] sm:$0xff]
    %v1697 = vld [vmem:[#allocation14 + $0x380] sm:$0xff]
    %v1698 = vld [vmem:[#allocation14 + $0x388] sm:$0xff]
    %v1699 = vld [vmem:[#allocation14 + $0x390] sm:$0xff]
    %v1700 = vld [vmem:[#allocation14 + $0x398] sm:$0xff]
    %v1701 = vld [vmem:[#allocation14 + $0x3a0] sm:$0xff]
    %v1702 = vld [vmem:[#allocation14 + $0x3a8] sm:$0xff]
    %v1703 = vld [vmem:[#allocation14 + $0x3b0] sm:$0xff]
    %v1704 = vld [vmem:[#allocation14 + $0x3b8] sm:$0xff]
    %v1705 = vld [vmem:[#allocation14 + $0x3c0] sm:$0xff]
    %v1706 = vld [vmem:[#allocation14 + $0x3c8] sm:$0xff]
    %v1707 = vld [vmem:[#allocation14 + $0x3d0] sm:$0xff]
    %v1708 = vld [vmem:[#allocation14 + $0x3d8] sm:$0xff]
    %v1709 = vld [vmem:[#allocation14 + $0x3e0] sm:$0xff]
    %v1710 = vld [vmem:[#allocation14 + $0x3e8] sm:$0xff]
    %v1711 = vld [vmem:[#allocation14 + $0x3f0] sm:$0xff]
    %v1712 = vld [vmem:[#allocation14 + $0x3f8] sm:$0xff]
    %v1713 = vld [vmem:[#allocation16] sm:$0xff]
    %v1715 = vlaneseq
    %v1716 = vshrl.u32 %v1715, 7
    %v1717 = vsub.s32 0, %v1716
    %v1718 = vrot.slane %v1713, %v1717
    %v1719 = vlaneseq
    %v1720 = vshrl.u32 %v1719, 7
    %v1721 = vsub.s32 1, %v1720
    %v1722 = vrot.slane %v1713, %v1721
    %v1723 = vlaneseq
    %v1724 = vshrl.u32 %v1723, 7
    %v1725 = vsub.s32 2, %v1724
    %v1726 = vrot.slane %v1713, %v1725
    %v1727 = vlaneseq
    %v1728 = vshrl.u32 %v1727, 7
    %v1729 = vsub.s32 3, %v1728
    %v1730 = vrot.slane %v1713, %v1729
    %v1731 = vlaneseq
    %v1732 = vshrl.u32 %v1731, 7
    %v1733 = vsub.s32 4, %v1732
    %v1734 = vrot.slane %v1713, %v1733
    %v1735 = vlaneseq
    %v1736 = vshrl.u32 %v1735, 7
    %v1737 = vsub.s32 5, %v1736
    %v1738 = vrot.slane %v1713, %v1737
    %v1739 = vlaneseq
    %v1740 = vshrl.u32 %v1739, 7
    %v1741 = vsub.s32 6, %v1740
    %v1742 = vrot.slane %v1713, %v1741
    %v1743 = vlaneseq
    %v1744 = vshrl.u32 %v1743, 7
    %v1745 = vsub.s32 7, %v1744
    %v1746 = vrot.slane %v1713, %v1745
    %v1883 = vunpack.c.l.b16 %v1585
    %v1884 = vunpack.c.h.b16 %v1585
    %v1885 = vunpack.c.l.b16 %v1586
    %v1886 = vunpack.c.h.b16 %v1586
    %v1887 = vunpack.c.l.b16 %v1587
    %v1888 = vunpack.c.h.b16 %v1587
    %v1889 = vunpack.c.l.b16 %v1588
    %v1890 = vunpack.c.h.b16 %v1588
    %v1891 = vunpack.c.l.b16 %v1589
    %v1892 = vunpack.c.h.b16 %v1589
    %v1893 = vunpack.c.l.b16 %v1590
    %v1894 = vunpack.c.h.b16 %v1590
    %v1895 = vunpack.c.l.b16 %v1591
    %v1896 = vunpack.c.h.b16 %v1591
    %v1897 = vunpack.c.l.b16 %v1592
    %v1898 = vunpack.c.h.b16 %v1592
    %v1899 = vunpack.c.l.b16 %v1593
    %v1900 = vunpack.c.h.b16 %v1593
    %v1901 = vunpack.c.l.b16 %v1594
    %v1902 = vunpack.c.h.b16 %v1594
    %v1903 = vunpack.c.l.b16 %v1595
    %v1904 = vunpack.c.h.b16 %v1595
    %v1905 = vunpack.c.l.b16 %v1596
    %v1906 = vunpack.c.h.b16 %v1596
    %v1907 = vunpack.c.l.b16 %v1597
    %v1908 = vunpack.c.h.b16 %v1597
    %v1909 = vunpack.c.l.b16 %v1598
    %v1910 = vunpack.c.h.b16 %v1598
    %v1911 = vunpack.c.l.b16 %v1599
    %v1912 = vunpack.c.h.b16 %v1599
    %v1913 = vunpack.c.l.b16 %v1600
    %v1914 = vunpack.c.h.b16 %v1600
    %v1915 = vunpack.c.l.b16 %v1601
    %v1916 = vunpack.c.h.b16 %v1601
    %v1917 = vunpack.c.l.b16 %v1602
    %v1918 = vunpack.c.h.b16 %v1602
    %v1919 = vunpack.c.l.b16 %v1603
    %v1920 = vunpack.c.h.b16 %v1603
    %v1921 = vunpack.c.l.b16 %v1604
    %v1922 = vunpack.c.h.b16 %v1604
    %v1923 = vunpack.c.l.b16 %v1605
    %v1924 = vunpack.c.h.b16 %v1605
    %v1925 = vunpack.c.l.b16 %v1606
    %v1926 = vunpack.c.h.b16 %v1606
    %v1927 = vunpack.c.l.b16 %v1607
    %v1928 = vunpack.c.h.b16 %v1607
    %v1929 = vunpack.c.l.b16 %v1608
    %v1930 = vunpack.c.h.b16 %v1608
    %v1931 = vunpack.c.l.b16 %v1609
    %v1932 = vunpack.c.h.b16 %v1609
    %v1933 = vunpack.c.l.b16 %v1610
    %v1934 = vunpack.c.h.b16 %v1610
    %v1935 = vunpack.c.l.b16 %v1611
    %v1936 = vunpack.c.h.b16 %v1611
    %v1937 = vunpack.c.l.b16 %v1612
    %v1938 = vunpack.c.h.b16 %v1612
    %v1939 = vunpack.c.l.b16 %v1613
    %v1940 = vunpack.c.h.b16 %v1613
    %v1941 = vunpack.c.l.b16 %v1614
    %v1942 = vunpack.c.h.b16 %v1614
    %v1943 = vunpack.c.l.b16 %v1615
    %v1944 = vunpack.c.h.b16 %v1615
    %v1945 = vunpack.c.l.b16 %v1616
    %v1946 = vunpack.c.h.b16 %v1616
    %v1947 = vunpack.c.l.b16 %v1617
    %v1948 = vunpack.c.h.b16 %v1617
    %v1949 = vunpack.c.l.b16 %v1618
    %v1950 = vunpack.c.h.b16 %v1618
    %v1951 = vunpack.c.l.b16 %v1619
    %v1952 = vunpack.c.h.b16 %v1619
    %v1953 = vunpack.c.l.b16 %v1620
    %v1954 = vunpack.c.h.b16 %v1620
    %v1955 = vunpack.c.l.b16 %v1621
    %v1956 = vunpack.c.h.b16 %v1621
    %v1957 = vunpack.c.l.b16 %v1622
    %v1958 = vunpack.c.h.b16 %v1622
    %v1959 = vunpack.c.l.b16 %v1623
    %v1960 = vunpack.c.h.b16 %v1623
    %v1961 = vunpack.c.l.b16 %v1624
    %v1962 = vunpack.c.h.b16 %v1624
    %v1963 = vunpack.c.l.b16 %v1625
    %v1964 = vunpack.c.h.b16 %v1625
    %v1965 = vunpack.c.l.b16 %v1626
    %v1966 = vunpack.c.h.b16 %v1626
    %v1967 = vunpack.c.l.b16 %v1627
    %v1968 = vunpack.c.h.b16 %v1627
    %v1969 = vunpack.c.l.b16 %v1628
    %v1970 = vunpack.c.h.b16 %v1628
    %v1971 = vunpack.c.l.b16 %v1629
    %v1972 = vunpack.c.h.b16 %v1629
    %v1973 = vunpack.c.l.b16 %v1630
    %v1974 = vunpack.c.h.b16 %v1630
    %v1975 = vunpack.c.l.b16 %v1631
    %v1976 = vunpack.c.h.b16 %v1631
    %v1977 = vunpack.c.l.b16 %v1632
    %v1978 = vunpack.c.h.b16 %v1632
    %v1979 = vunpack.c.l.b16 %v1633
    %v1980 = vunpack.c.h.b16 %v1633
    %v1981 = vunpack.c.l.b16 %v1634
    %v1982 = vunpack.c.h.b16 %v1634
    %v1983 = vunpack.c.l.b16 %v1635
    %v1984 = vunpack.c.h.b16 %v1635
    %v1985 = vunpack.c.l.b16 %v1636
    %v1986 = vunpack.c.h.b16 %v1636
    %v1987 = vunpack.c.l.b16 %v1637
    %v1988 = vunpack.c.h.b16 %v1637
    %v1989 = vunpack.c.l.b16 %v1638
    %v1990 = vunpack.c.h.b16 %v1638
    %v1991 = vunpack.c.l.b16 %v1639
    %v1992 = vunpack.c.h.b16 %v1639
    %v1993 = vunpack.c.l.b16 %v1640
    %v1994 = vunpack.c.h.b16 %v1640
    %v1995 = vunpack.c.l.b16 %v1641
    %v1996 = vunpack.c.h.b16 %v1641
    %v1997 = vunpack.c.l.b16 %v1642
    %v1998 = vunpack.c.h.b16 %v1642
    %v1999 = vunpack.c.l.b16 %v1643
    %v2000 = vunpack.c.h.b16 %v1643
    %v2001 = vunpack.c.l.b16 %v1644
    %v2002 = vunpack.c.h.b16 %v1644
    %v2003 = vunpack.c.l.b16 %v1645
    %v2004 = vunpack.c.h.b16 %v1645
    %v2005 = vunpack.c.l.b16 %v1646
    %v2006 = vunpack.c.h.b16 %v1646
    %v2007 = vunpack.c.l.b16 %v1647
    %v2008 = vunpack.c.h.b16 %v1647
    %v2009 = vunpack.c.l.b16 %v1648
    %v2010 = vunpack.c.h.b16 %v1648
    %v2011 = vunpack.c.l.b16 %v1649
    %v2012 = vunpack.c.h.b16 %v1649
    %v2013 = vunpack.c.l.b16 %v1650
    %v2014 = vunpack.c.h.b16 %v1650
    %v2015 = vunpack.c.l.b16 %v1651
    %v2016 = vunpack.c.h.b16 %v1651
    %v2017 = vunpack.c.l.b16 %v1652
    %v2018 = vunpack.c.h.b16 %v1652
    %v2019 = vunpack.c.l.b16 %v1653
    %v2020 = vunpack.c.h.b16 %v1653
    %v2021 = vunpack.c.l.b16 %v1654
    %v2022 = vunpack.c.h.b16 %v1654
    %v2023 = vunpack.c.l.b16 %v1655
    %v2024 = vunpack.c.h.b16 %v1655
    %v2025 = vunpack.c.l.b16 %v1656
    %v2026 = vunpack.c.h.b16 %v1656
    %v2027 = vunpack.c.l.b16 %v1657
    %v2028 = vunpack.c.h.b16 %v1657
    %v2029 = vunpack.c.l.b16 %v1658
    %v2030 = vunpack.c.h.b16 %v1658
    %v2031 = vunpack.c.l.b16 %v1659
    %v2032 = vunpack.c.h.b16 %v1659
    %v2033 = vunpack.c.l.b16 %v1660
    %v2034 = vunpack.c.h.b16 %v1660
    %v2035 = vunpack.c.l.b16 %v1661
    %v2036 = vunpack.c.h.b16 %v1661
    %v2037 = vunpack.c.l.b16 %v1662
    %v2038 = vunpack.c.h.b16 %v1662
    %v2039 = vunpack.c.l.b16 %v1663
    %v2040 = vunpack.c.h.b16 %v1663
    %v2041 = vunpack.c.l.b16 %v1664
    %v2042 = vunpack.c.h.b16 %v1664
    %v2043 = vunpack.c.l.b16 %v1665
    %v2044 = vunpack.c.h.b16 %v1665
    %v2045 = vunpack.c.l.b16 %v1666
    %v2046 = vunpack.c.h.b16 %v1666
    %v2047 = vunpack.c.l.b16 %v1667
    %v2048 = vunpack.c.h.b16 %v1667
    %v2049 = vunpack.c.l.b16 %v1668
    %v2050 = vunpack.c.h.b16 %v1668
    %v2051 = vunpack.c.l.b16 %v1669
    %v2052 = vunpack.c.h.b16 %v1669
    %v2053 = vunpack.c.l.b16 %v1670
    %v2054 = vunpack.c.h.b16 %v1670
    %v2055 = vunpack.c.l.b16 %v1671
    %v2056 = vunpack.c.h.b16 %v1671
    %v2057 = vunpack.c.l.b16 %v1672
    %v2058 = vunpack.c.h.b16 %v1672
    %v2059 = vunpack.c.l.b16 %v1673
    %v2060 = vunpack.c.h.b16 %v1673
    %v2061 = vunpack.c.l.b16 %v1674
    %v2062 = vunpack.c.h.b16 %v1674
    %v2063 = vunpack.c.l.b16 %v1675
    %v2064 = vunpack.c.h.b16 %v1675
    %v2065 = vunpack.c.l.b16 %v1676
    %v2066 = vunpack.c.h.b16 %v1676
    %v2067 = vunpack.c.l.b16 %v1677
    %v2068 = vunpack.c.h.b16 %v1677
    %v2069 = vunpack.c.l.b16 %v1678
    %v2070 = vunpack.c.h.b16 %v1678
    %v2071 = vunpack.c.l.b16 %v1679
    %v2072 = vunpack.c.h.b16 %v1679
    %v2073 = vunpack.c.l.b16 %v1680
    %v2074 = vunpack.c.h.b16 %v1680
    %v2075 = vunpack.c.l.b16 %v1681
    %v2076 = vunpack.c.h.b16 %v1681
    %v2077 = vunpack.c.l.b16 %v1682
    %v2078 = vunpack.c.h.b16 %v1682
    %v2079 = vunpack.c.l.b16 %v1683
    %v2080 = vunpack.c.h.b16 %v1683
    %v2081 = vunpack.c.l.b16 %v1684
    %v2082 = vunpack.c.h.b16 %v1684
    %v2083 = vunpack.c.l.b16 %v1685
    %v2084 = vunpack.c.h.b16 %v1685
    %v2085 = vunpack.c.l.b16 %v1686
    %v2086 = vunpack.c.h.b16 %v1686
    %v2087 = vunpack.c.l.b16 %v1687
    %v2088 = vunpack.c.h.b16 %v1687
    %v2089 = vunpack.c.l.b16 %v1688
    %v2090 = vunpack.c.h.b16 %v1688
    %v2091 = vunpack.c.l.b16 %v1689
    %v2092 = vunpack.c.h.b16 %v1689
    %v2093 = vunpack.c.l.b16 %v1690
    %v2094 = vunpack.c.h.b16 %v1690
    %v2095 = vunpack.c.l.b16 %v1691
    %v2096 = vunpack.c.h.b16 %v1691
    %v2097 = vunpack.c.l.b16 %v1692
    %v2098 = vunpack.c.h.b16 %v1692
    %v2099 = vunpack.c.l.b16 %v1693
    %v2100 = vunpack.c.h.b16 %v1693
    %v2101 = vunpack.c.l.b16 %v1694
    %v2102 = vunpack.c.h.b16 %v1694
    %v2103 = vunpack.c.l.b16 %v1695
    %v2104 = vunpack.c.h.b16 %v1695
    %v2105 = vunpack.c.l.b16 %v1696
    %v2106 = vunpack.c.h.b16 %v1696
    %v2107 = vunpack.c.l.b16 %v1697
    %v2108 = vunpack.c.h.b16 %v1697
    %v2109 = vunpack.c.l.b16 %v1698
    %v2110 = vunpack.c.h.b16 %v1698
    %v2111 = vunpack.c.l.b16 %v1699
    %v2112 = vunpack.c.h.b16 %v1699
    %v2113 = vunpack.c.l.b16 %v1700
    %v2114 = vunpack.c.h.b16 %v1700
    %v2115 = vunpack.c.l.b16 %v1701
    %v2116 = vunpack.c.h.b16 %v1701
    %v2117 = vunpack.c.l.b16 %v1702
    %v2118 = vunpack.c.h.b16 %v1702
    %v2119 = vunpack.c.l.b16 %v1703
    %v2120 = vunpack.c.h.b16 %v1703
    %v2121 = vunpack.c.l.b16 %v1704
    %v2122 = vunpack.c.h.b16 %v1704
    %v2123 = vunpack.c.l.b16 %v1705
    %v2124 = vunpack.c.h.b16 %v1705
    %v2125 = vunpack.c.l.b16 %v1706
    %v2126 = vunpack.c.h.b16 %v1706
    %v2127 = vunpack.c.l.b16 %v1707
    %v2128 = vunpack.c.h.b16 %v1707
    %v2129 = vunpack.c.l.b16 %v1708
    %v2130 = vunpack.c.h.b16 %v1708
    %v2131 = vunpack.c.l.b16 %v1709
    %v2132 = vunpack.c.h.b16 %v1709
    %v2133 = vunpack.c.l.b16 %v1710
    %v2134 = vunpack.c.h.b16 %v1710
    %v2135 = vunpack.c.l.b16 %v1711
    %v2136 = vunpack.c.h.b16 %v1711
    %v2137 = vunpack.c.l.b16 %v1712
    %v2138 = vunpack.c.h.b16 %v1712
    %v2139 = vpack.c.b16 %v1891, %v1883
    %v2140 = vpack.c.b16 %v1892, %v1884
    %v2141 = vpack.c.b16 %v1893, %v1885
    %v2142 = vpack.c.b16 %v1894, %v1886
    %v2143 = vpack.c.b16 %v1895, %v1887
    %v2144 = vpack.c.b16 %v1896, %v1888
    %v2145 = vpack.c.b16 %v1897, %v1889
    %v2146 = vpack.c.b16 %v1898, %v1890
    %v2147 = vpack.c.b16 %v1907, %v1899
    %v2148 = vpack.c.b16 %v1908, %v1900
    %v2149 = vpack.c.b16 %v1909, %v1901
    %v2150 = vpack.c.b16 %v1910, %v1902
    %v2151 = vpack.c.b16 %v1911, %v1903
    %v2152 = vpack.c.b16 %v1912, %v1904
    %v2153 = vpack.c.b16 %v1913, %v1905
    %v2154 = vpack.c.b16 %v1914, %v1906
    %v2155 = vpack.c.b16 %v1923, %v1915
    %v2156 = vpack.c.b16 %v1924, %v1916
    %v2157 = vpack.c.b16 %v1925, %v1917
    %v2158 = vpack.c.b16 %v1926, %v1918
    %v2159 = vpack.c.b16 %v1927, %v1919
    %v2160 = vpack.c.b16 %v1928, %v1920
    %v2161 = vpack.c.b16 %v1929, %v1921
    %v2162 = vpack.c.b16 %v1930, %v1922
    %v2163 = vpack.c.b16 %v1939, %v1931
    %v2164 = vpack.c.b16 %v1940, %v1932
    %v2165 = vpack.c.b16 %v1941, %v1933
    %v2166 = vpack.c.b16 %v1942, %v1934
    %v2167 = vpack.c.b16 %v1943, %v1935
    %v2168 = vpack.c.b16 %v1944, %v1936
    %v2169 = vpack.c.b16 %v1945, %v1937
    %v2170 = vpack.c.b16 %v1946, %v1938
    %v2171 = vpack.c.b16 %v1955, %v1947
    %v2172 = vpack.c.b16 %v1956, %v1948
    %v2173 = vpack.c.b16 %v1957, %v1949
    %v2174 = vpack.c.b16 %v1958, %v1950
    %v2175 = vpack.c.b16 %v1959, %v1951
    %v2176 = vpack.c.b16 %v1960, %v1952
    %v2177 = vpack.c.b16 %v1961, %v1953
    %v2178 = vpack.c.b16 %v1962, %v1954
    %v2179 = vpack.c.b16 %v1971, %v1963
    %v2180 = vpack.c.b16 %v1972, %v1964
    %v2181 = vpack.c.b16 %v1973, %v1965
    %v2182 = vpack.c.b16 %v1974, %v1966
    %v2183 = vpack.c.b16 %v1975, %v1967
    %v2184 = vpack.c.b16 %v1976, %v1968
    %v2185 = vpack.c.b16 %v1977, %v1969
    %v2186 = vpack.c.b16 %v1978, %v1970
    %v2187 = vpack.c.b16 %v1987, %v1979
    %v2188 = vpack.c.b16 %v1988, %v1980
    %v2189 = vpack.c.b16 %v1989, %v1981
    %v2190 = vpack.c.b16 %v1990, %v1982
    %v2191 = vpack.c.b16 %v1991, %v1983
    %v2192 = vpack.c.b16 %v1992, %v1984
    %v2193 = vpack.c.b16 %v1993, %v1985
    %v2194 = vpack.c.b16 %v1994, %v1986
    %v2195 = vpack.c.b16 %v2003, %v1995
    %v2196 = vpack.c.b16 %v2004, %v1996
    %v2197 = vpack.c.b16 %v2005, %v1997
    %v2198 = vpack.c.b16 %v2006, %v1998
    %v2199 = vpack.c.b16 %v2007, %v1999
    %v2200 = vpack.c.b16 %v2008, %v2000
    %v2201 = vpack.c.b16 %v2009, %v2001
    %v2202 = vpack.c.b16 %v2010, %v2002
    %v2203 = vpack.c.b16 %v2019, %v2011
    %v2204 = vpack.c.b16 %v2020, %v2012
    %v2205 = vpack.c.b16 %v2021, %v2013
    %v2206 = vpack.c.b16 %v2022, %v2014
    %v2207 = vpack.c.b16 %v2023, %v2015
    %v2208 = vpack.c.b16 %v2024, %v2016
    %v2209 = vpack.c.b16 %v2025, %v2017
    %v2210 = vpack.c.b16 %v2026, %v2018
    %v2211 = vpack.c.b16 %v2035, %v2027
    %v2212 = vpack.c.b16 %v2036, %v2028
    %v2213 = vpack.c.b16 %v2037, %v2029
    %v2214 = vpack.c.b16 %v2038, %v2030
    %v2215 = vpack.c.b16 %v2039, %v2031
    %v2216 = vpack.c.b16 %v2040, %v2032
    %v2217 = vpack.c.b16 %v2041, %v2033
    %v2218 = vpack.c.b16 %v2042, %v2034
    %v2219 = vpack.c.b16 %v2051, %v2043
    %v2220 = vpack.c.b16 %v2052, %v2044
    %v2221 = vpack.c.b16 %v2053, %v2045
    %v2222 = vpack.c.b16 %v2054, %v2046
    %v2223 = vpack.c.b16 %v2055, %v2047
    %v2224 = vpack.c.b16 %v2056, %v2048
    %v2225 = vpack.c.b16 %v2057, %v2049
    %v2226 = vpack.c.b16 %v2058, %v2050
    %v2227 = vpack.c.b16 %v2067, %v2059
    %v2228 = vpack.c.b16 %v2068, %v2060
    %v2229 = vpack.c.b16 %v2069, %v2061
    %v2230 = vpack.c.b16 %v2070, %v2062
    %v2231 = vpack.c.b16 %v2071, %v2063
    %v2232 = vpack.c.b16 %v2072, %v2064
    %v2233 = vpack.c.b16 %v2073, %v2065
    %v2234 = vpack.c.b16 %v2074, %v2066
    %v2235 = vpack.c.b16 %v2083, %v2075
    %v2236 = vpack.c.b16 %v2084, %v2076
    %v2237 = vpack.c.b16 %v2085, %v2077
    %v2238 = vpack.c.b16 %v2086, %v2078
    %v2239 = vpack.c.b16 %v2087, %v2079
    %v2240 = vpack.c.b16 %v2088, %v2080
    %v2241 = vpack.c.b16 %v2089, %v2081
    %v2242 = vpack.c.b16 %v2090, %v2082
    %v2243 = vpack.c.b16 %v2099, %v2091
    %v2244 = vpack.c.b16 %v2100, %v2092
    %v2245 = vpack.c.b16 %v2101, %v2093
    %v2246 = vpack.c.b16 %v2102, %v2094
    %v2247 = vpack.c.b16 %v2103, %v2095
    %v2248 = vpack.c.b16 %v2104, %v2096
    %v2249 = vpack.c.b16 %v2105, %v2097
    %v2250 = vpack.c.b16 %v2106, %v2098
    %v2251 = vpack.c.b16 %v2115, %v2107
    %v2252 = vpack.c.b16 %v2116, %v2108
    %v2253 = vpack.c.b16 %v2117, %v2109
    %v2254 = vpack.c.b16 %v2118, %v2110
    %v2255 = vpack.c.b16 %v2119, %v2111
    %v2256 = vpack.c.b16 %v2120, %v2112
    %v2257 = vpack.c.b16 %v2121, %v2113
    %v2258 = vpack.c.b16 %v2122, %v2114
    %v2259 = vpack.c.b16 %v2131, %v2123
    %v2260 = vpack.c.b16 %v2132, %v2124
    %v2261 = vpack.c.b16 %v2133, %v2125
    %v2262 = vpack.c.b16 %v2134, %v2126
    %v2263 = vpack.c.b16 %v2135, %v2127
    %v2264 = vpack.c.b16 %v2136, %v2128
    %v2265 = vpack.c.b16 %v2137, %v2129
    %v2266 = vpack.c.b16 %v2138, %v2130
    %2395 = vmatprep.subr.bf16.mxu0 %v2140
    %2396 = vmatpush1.bf16.msra.mxu0 %v2139
    %2397 = vmatprep.subr.bf16.mxu0 %v2148
    %2398 = vmatpush1.bf16.msra.mxu0 %v2147
    %2399 = vmatprep.subr.bf16.mxu0 %v2156
    %2400 = vmatpush1.bf16.msra.mxu0 %v2155
    %2401 = vmatprep.subr.bf16.mxu0 %v2164
    %2402 = vmatpush1.bf16.msra.mxu0 %v2163
    %2403 = vmatprep.subr.bf16.mxu0 %v2172
    %2404 = vmatpush1.bf16.msra.mxu0 %v2171
    %2405 = vmatprep.subr.bf16.mxu0 %v2180
    %2406 = vmatpush1.bf16.msra.mxu0 %v2179
    %2407 = vmatprep.subr.bf16.mxu0 %v2188
    %2408 = vmatpush1.bf16.msra.mxu0 %v2187
    %2409 = vmatprep.subr.bf16.mxu0 %v2196
    %2410 = vmatpush1.bf16.msra.mxu0 %v2195
    %2411 = vmatprep.subr.bf16.mxu0 %v2204
    %2412 = vmatpush1.bf16.msra.mxu0 %v2203
    %2413 = vmatprep.subr.bf16.mxu0 %v2212
    %2414 = vmatpush1.bf16.msra.mxu0 %v2211
    %2415 = vmatprep.subr.bf16.mxu0 %v2220
    %2416 = vmatpush1.bf16.msra.mxu0 %v2219
    %2417 = vmatprep.subr.bf16.mxu0 %v2228
    %2418 = vmatpush1.bf16.msra.mxu0 %v2227
    %2419 = vmatprep.subr.bf16.mxu0 %v2236
    %2420 = vmatpush1.bf16.msra.mxu0 %v2235
    %2421 = vmatprep.subr.bf16.mxu0 %v2244
    %2422 = vmatpush1.bf16.msra.mxu0 %v2243
    %2423 = vmatprep.subr.bf16.mxu0 %v2252
    %2424 = vmatpush1.bf16.msra.mxu0 %v2251
    %2425 = vmatprep.subr.bf16.mxu0 %v2260
    %2426 = vmatpush1.bf16.msra.mxu0 %v2259
    %2427 = vmatprep.mubr.bf16.mxu0 %v1584
    %2428 = vmatmul.mubr.bf16.gmra.mrb[0].mxu0 %v1583
    %v2429 = vpop.f32.mrb[0].mxu0
    %v2430 = vadd.f32 %v1718, %v2429
    %v2431 = vpop.f32.mrb[0].mxu0
    %v2432 = vadd.f32 %v1722, %v2431
    %v2433 = vpop.f32.mrb[0].mxu0
    %v2434 = vpop.f32.mrb[0].mxu0
    %2435 = vdwg.mxu0
    %2436 = vmatprep.subr.bf16.mxu0 %v2142
    %2437 = vmatpush1.bf16.msra.mxu0 %v2141
    %2438 = vmatprep.subr.bf16.mxu0 %v2150
    %2439 = vmatpush1.bf16.msra.mxu0 %v2149
    %2440 = vmatprep.subr.bf16.mxu0 %v2158
    %2441 = vmatpush1.bf16.msra.mxu0 %v2157
    %2442 = vmatprep.subr.bf16.mxu0 %v2166
    %2443 = vmatpush1.bf16.msra.mxu0 %v2165
    %2444 = vmatprep.subr.bf16.mxu0 %v2174
    %2445 = vmatpush1.bf16.msra.mxu0 %v2173
    %2446 = vmatprep.subr.bf16.mxu0 %v2182
    %2447 = vmatpush1.bf16.msra.mxu0 %v2181
    %2448 = vmatprep.subr.bf16.mxu0 %v2190
    %2449 = vmatpush1.bf16.msra.mxu0 %v2189
    %2450 = vmatprep.subr.bf16.mxu0 %v2198
    %2451 = vmatpush1.bf16.msra.mxu0 %v2197
    %2452 = vmatprep.subr.bf16.mxu0 %v2206
    %2453 = vmatpush1.bf16.msra.mxu0 %v2205
    %2454 = vmatprep.subr.bf16.mxu0 %v2214
    %2455 = vmatpush1.bf16.msra.mxu0 %v2213
    %2456 = vmatprep.subr.bf16.mxu0 %v2222
    %2457 = vmatpush1.bf16.msra.mxu0 %v2221
    %2458 = vmatprep.subr.bf16.mxu0 %v2230
    %2459 = vmatpush1.bf16.msra.mxu0 %v2229
    %2460 = vmatprep.subr.bf16.mxu0 %v2238
    %2461 = vmatpush1.bf16.msra.mxu0 %v2237
    %2462 = vmatprep.subr.bf16.mxu0 %v2246
    %2463 = vmatpush1.bf16.msra.mxu0 %v2245
    %2464 = vmatprep.subr.bf16.mxu0 %v2254
    %2465 = vmatpush1.bf16.msra.mxu0 %v2253
    %2466 = vmatprep.subr.bf16.mxu0 %v2262
    %2467 = vmatpush1.bf16.msra.mxu0 %v2261
    %2468 = vmatprep.mubr.bf16.mxu0 %v1584
    %2469 = vmatmul.mubr.bf16.gmra.mrb[0].mxu0 %v1583
    %v2470 = vpop.f32.mrb[0].mxu0
    %v2471 = vadd.f32 %v1726, %v2470
    %v2472 = vpop.f32.mrb[0].mxu0
    %v2473 = vadd.f32 %v1730, %v2472
    %v2474 = vpop.f32.mrb[0].mxu0
    %v2475 = vpop.f32.mrb[0].mxu0
    %2476 = vdwg.mxu0
    %2477 = vmatprep.subr.bf16.mxu0 %v2144
    %2478 = vmatpush1.bf16.msra.mxu0 %v2143
    %2479 = vmatprep.subr.bf16.mxu0 %v2152
    %2480 = vmatpush1.bf16.msra.mxu0 %v2151
    %2481 = vmatprep.subr.bf16.mxu0 %v2160
    %2482 = vmatpush1.bf16.msra.mxu0 %v2159
    %2483 = vmatprep.subr.bf16.mxu0 %v2168
    %2484 = vmatpush1.bf16.msra.mxu0 %v2167
    %2485 = vmatprep.subr.bf16.mxu0 %v2176
    %2486 = vmatpush1.bf16.msra.mxu0 %v2175
    %2487 = vmatprep.subr.bf16.mxu0 %v2184
    %2488 = vmatpush1.bf16.msra.mxu0 %v2183
    %2489 = vmatprep.subr.bf16.mxu0 %v2192
    %2490 = vmatpush1.bf16.msra.mxu0 %v2191
    %2491 = vmatprep.subr.bf16.mxu0 %v2200
    %2492 = vmatpush1.bf16.msra.mxu0 %v2199
    %2493 = vmatprep.subr.bf16.mxu0 %v2208
    %2494 = vmatpush1.bf16.msra.mxu0 %v2207
    %2495 = vmatprep.subr.bf16.mxu0 %v2216
    %2496 = vmatpush1.bf16.msra.mxu0 %v2215
    %2497 = vmatprep.subr.bf16.mxu0 %v2224
    %2498 = vmatpush1.bf16.msra.mxu0 %v2223
    %2499 = vmatprep.subr.bf16.mxu0 %v2232
    %2500 = vmatpush1.bf16.msra.mxu0 %v2231
    %2501 = vmatprep.subr.bf16.mxu0 %v2240
    %2502 = vmatpush1.bf16.msra.mxu0 %v2239
    %2503 = vmatprep.subr.bf16.mxu0 %v2248
    %2504 = vmatpush1.bf16.msra.mxu0 %v2247
    %2505 = vmatprep.subr.bf16.mxu0 %v2256
    %2506 = vmatpush1.bf16.msra.mxu0 %v2255
    %2507 = vmatprep.subr.bf16.mxu0 %v2264
    %2508 = vmatpush1.bf16.msra.mxu0 %v2263
    %2509 = vmatprep.mubr.bf16.mxu0 %v1584
    %2510 = vmatmul.mubr.bf16.gmra.mrb[0].mxu0 %v1583
    %v2511 = vpop.f32.mrb[0].mxu0
    %v2512 = vadd.f32 %v1734, %v2511
    %v2513 = vpop.f32.mrb[0].mxu0
    %v2514 = vadd.f32 %v1738, %v2513
    %v2515 = vpop.f32.mrb[0].mxu0
    %v2516 = vpop.f32.mrb[0].mxu0
    %2517 = vdwg.mxu0
    %2518 = vmatprep.subr.bf16.mxu0 %v2146
    %2519 = vmatpush1.bf16.msra.mxu0 %v2145
    %2520 = vmatprep.subr.bf16.mxu0 %v2154
    %2521 = vmatpush1.bf16.msra.mxu0 %v2153
    %2522 = vmatprep.subr.bf16.mxu0 %v2162
    %2523 = vmatpush1.bf16.msra.mxu0 %v2161
    %2524 = vmatprep.subr.bf16.mxu0 %v2170
    %2525 = vmatpush1.bf16.msra.mxu0 %v2169
    %2526 = vmatprep.subr.bf16.mxu0 %v2178
    %2527 = vmatpush1.bf16.msra.mxu0 %v2177
    %2528 = vmatprep.subr.bf16.mxu0 %v2186
    %2529 = vmatpush1.bf16.msra.mxu0 %v2185
    %2530 = vmatprep.subr.bf16.mxu0 %v2194
    %2531 = vmatpush1.bf16.msra.mxu0 %v2193
    %2532 = vmatprep.subr.bf16.mxu0 %v2202
    %2533 = vmatpush1.bf16.msra.mxu0 %v2201
    %2534 = vmatprep.subr.bf16.mxu0 %v2210
    %2535 = vmatpush1.bf16.msra.mxu0 %v2209
    %2536 = vmatprep.subr.bf16.mxu0 %v2218
    %2537 = vmatpush1.bf16.msra.mxu0 %v2217
    %2538 = vmatprep.subr.bf16.mxu0 %v2226
    %2539 = vmatpush1.bf16.msra.mxu0 %v2225
    %2540 = vmatprep.subr.bf16.mxu0 %v2234
    %2541 = vmatpush1.bf16.msra.mxu0 %v2233
    %2542 = vmatprep.subr.bf16.mxu0 %v2242
    %2543 = vmatpush1.bf16.msra.mxu0 %v2241
    %2544 = vmatprep.subr.bf16.mxu0 %v2250
    %2545 = vmatpush1.bf16.msra.mxu0 %v2249
    %2546 = vmatprep.subr.bf16.mxu0 %v2258
    %2547 = vmatpush1.bf16.msra.mxu0 %v2257
    %2548 = vmatprep.subr.bf16.mxu0 %v2266
    %2549 = vmatpush1.bf16.msra.mxu0 %v2265
    %2550 = vmatprep.mubr.bf16.mxu0 %v1584
    %2551 = vmatmul.mubr.bf16.gmra.mrb[0].mxu0 %v1583
    %v2552 = vpop.f32.mrb[0].mxu0
    %v2553 = vadd.f32 %v1742, %v2552
    %v2554 = vpop.f32.mrb[0].mxu0
    %v2555 = vadd.f32 %v1746, %v2554
    %v2556 = vpop.f32.mrb[0].mxu0
    %v2557 = vpop.f32.mrb[0].mxu0
    %2558 = vdwg.mxu0
    %v2559 = vpack.c.bf16 %v2430, %v2430
    %v2560 = vpack.c.bf16 %v2432, %v2432
    %v2561 = vpack.c.bf16 %v2471, %v2471
    %v2562 = vpack.c.bf16 %v2473, %v2473
    %v2563 = vpack.c.bf16 %v2512, %v2512
    %v2564 = vpack.c.bf16 %v2514, %v2514
    %v2565 = vpack.c.bf16 %v2553, %v2553
    %v2566 = vpack.c.bf16 %v2555, %v2555
    %v2575 = vunpack.c.l.b16 %v2559
    %v2576 = vunpack.c.l.b16 %v2560
    %v2577 = vunpack.c.l.b16 %v2561
    %v2578 = vunpack.c.l.b16 %v2562
    %v2579 = vunpack.c.l.b16 %v2563
    %v2580 = vunpack.c.l.b16 %v2564
    %v2581 = vunpack.c.l.b16 %v2565
    %v2582 = vunpack.c.l.b16 %v2566
    %v2583 = vpack.c.b16 %v2576, %v2575
    %v2584 = vpack.c.b16 %v2578, %v2577
    %v2585 = vpack.c.b16 %v2580, %v2579
    %v2586 = vpack.c.b16 %v2582, %v2581
    %2591 = vst [vmem:[#allocation17] sm:$0xff] %v2583
    %2592 = vst [vmem:[#allocation17 + $0x8] sm:$0xff] %v2584
    %2593 = vst [vmem:[#allocation17 + $0x10] sm:$0xff] %v2585
    %2594 = vst [vmem:[#allocation17 + $0x18] sm:$0xff] %v2586
    // Predicated region
    $region74: #{conv_autoencoder_pallas.1} parent=1 // pred_check
      _
    $region75: #{conv_autoencoder_pallas.1} parent=1 // pred_check_branch
      %2596 = sbr.rel (0) target = $region77
    $region76: #{conv_autoencoder_pallas.1} parent=1 // pred_region
      %s2598 = ssub.s32 512, 512
      %2599 = vsyncadd [#allocation4], %s2598
      %s2601 = sshll.u32 [#allocation17], 4
      %s2602 = int_to_ptr.vmem [resolvable:$true] %s2601
      %2604 = dma.vmem_to_hbm [thread:$0]  %s2602, 512, %s9, [#allocation4]
    $region77: #{conv_autoencoder_pallas.1} parent=1 // pred_fallthru
      _
    // Predicated region
    $region78: #{conv_autoencoder_pallas.1} parent=1 // pred_check
      _
    $region79: #{conv_autoencoder_pallas.1} parent=1 // pred_check_branch
      %2606 = sbr.rel (0) target = $region81
    $region80: #{conv_autoencoder_pallas.1} parent=1 // pred_region
      %2607 = dma.done [#allocation4], 512
    $region81: #{conv_autoencoder_pallas.1} parent=1 // pred_fallthru
      _
    %2608 = vsyncpa [#allocation3], 1
    %2609 = vsyncpa [#allocation6], 1
    %2610 = vsyncpa [#allocation9], 1
    %2611 = vsyncpa [#allocation12], 1
    %2612 = vsyncpa [#allocation15], 1
    %2613 = vsyncpa [#allocation4], 1

</llo_original>
